<compile_context>
chip_gen: v5e
topology: v5e:2x2
jax: 0.10.0
libtpu: 0.0.40
codegen_flags: <defaults>
</compile_context>

<pallas_src>
import jax
import jax.numpy as jnp
from jax.experimental import pallas as pl
from jax.experimental.pallas import tpu as pltpu


def _round_up(x, m):
    return ((x + m - 1) // m) * m


def _device_kind():
    try:
        return jax.devices()[0].device_kind.lower()
    except Exception:
        return ""


def _lstm_classifier_kernel(x_ref, wih_ref, whh_ref, b_ref,
                            w1_ref, b1_ref, w2_ref, b2_ref,
                            out_ref, pre_a, pre_b, h_sc, c_sc):
    """Layer-major LSTM with in-kernel time loop, packed gates, fused next-layer proj."""
    L = wih_ref.shape[0]
    Dp = wih_ref.shape[1]
    Bb, G4 = h_sc.shape
    Hb = G4 // 4
    T = x_ref.shape[0] // Bb

    # Layer 0: hoisted input projection for ALL T timesteps in one big MXU matmul.
    pre_a[...] = jnp.dot(x_ref[...], wih_ref[0],
                         preferred_element_type=jnp.float32) + b_ref[0]

    for l in range(L):  # num_layers: small & static
        pre_cur = pre_a if (l % 2 == 0) else pre_b
        pre_nxt = pre_b if (l % 2 == 0) else pre_a
        fuse_next = l + 1 < L
        whh_l = whh_ref[l]                          # hoist weight reads out of time loop
        wih_n = wih_ref[l + 1] if fuse_next else None
        b_n = b_ref[l + 1] if fuse_next else None

        h_sc[...] = jnp.zeros_like(h_sc)
        c_sc[...] = jnp.zeros_like(c_sc)

        def step(t, carry=0):
            start = t * Bb
            if not isinstance(start, int):
                start = pl.multiple_of(start, 8)
            h_full = h_sc[...]
            h_mat = (h_full[:, :Dp] if G4 > Dp else h_full).astype(jnp.bfloat16)
            gates = pre_cur[pl.ds(start, Bb), :] + jnp.dot(
                h_mat, whh_l, preferred_element_type=jnp.float32)       # (Bb, G4) f32
            # PyTorch gate order [i | f | g | o], packed in Hb-lane blocks.
            sg = jax.nn.sigmoid(gates)
            th = jnp.tanh(gates)
            i_g = sg                                       # block 0 already at lane 0
            f_g = pltpu.roll(sg, G4 - 1 * Hb, axis=1)      # block 1 -> lane 0 (XLU)
            g_g = pltpu.roll(th, G4 - 2 * Hb, axis=1)      # block 2 -> lane 0
            o_g = pltpu.roll(sg, G4 - 3 * Hb, axis=1)      # block 3 -> lane 0
            # Real state lives in lanes [0, H); remaining lanes carry bounded garbage
            # that every matmul kills via zero-padded weight rows.
            c_new = f_g * c_sc[...] + i_g * g_g
            h_new = o_g * jnp.tanh(c_new)
            c_sc[...] = c_new
            h_sc[...] = h_new
            if fuse_next:
                # Next layer's input projection: off the recurrence critical path,
                # overlaps MXU issue with this step's EUP/VPU gate math.
                hn = (h_new[:, :Dp] if G4 > Dp else h_new).astype(jnp.bfloat16)
                pre_nxt[pl.ds(start, Bb), :] = jnp.dot(
                    hn, wih_n, preferred_element_type=jnp.float32) + b_n
            return carry

        if T <= 16:
            for t in range(T):                 # tiny T: straight-line code
                step(t)
        else:
            jax.lax.fori_loop(0, T, step, 0, unroll=2)

    # Classifier head on the top layer's last-timestep hidden state.
    h_full = h_sc[...]
    h_last = (h_full[:, :Dp] if G4 > Dp else h_full).astype(jnp.bfloat16)
    out1 = jnp.dot(h_last, w1_ref[...],
                   preferred_element_type=jnp.float32) + b1_ref[...]     # (Bb, Op)
    # TODO(synk): nn.Dropout(0.5) is identity in eval mode; no RNG mask applied here.
    logits = jnp.dot(out1.astype(jnp.bfloat16), w2_ref[...],
                     preferred_element_type=jnp.float32) + b2_ref[...]   # (Bb, 128)
    out_ref[...] = jax.nn.sigmoid(logits)                                # lane-dense store


def _prep_lstm_w(w, L, H, Hb, Dp):
    """(L, 4H, K) PyTorch weight -> (L, Dp, 4*Hb) transposed, per-gate packed+padded, bf16."""
    K = w.shape[2]
    w = w.reshape(L, 4, H, K)
    w = jnp.pad(w, ((0, 0), (0, 0), (0, Hb - H), (0, Dp - K)))
    w = jnp.transpose(w, (0, 3, 1, 2)).reshape(L, Dp, 4 * Hb)
    return w.astype(jnp.bfloat16)


def _prep_lstm_b(b_ih, b_hh, L, H, Hb):
    """(L, 4H) b_ih + b_hh -> (L, 1, 4*Hb) per-gate packed+padded, f32."""
    b = (b_ih + b_hh).reshape(L, 4, H)
    b = jnp.pad(b, ((0, 0), (0, 0), (0, Hb - H)))
    return b.reshape(L, 1, 4 * Hb).astype(jnp.float32)


def lstm_classifier_forward(token_ids, params):
    """token_ids: (B, T) int32. Returns (B, 1) float32 sigmoid probabilities."""
    emb = params["embedding"][token_ids]                  # (B, T, E) gather (glue in JAX)
    B, T, E = emb.shape
    L, fourH, E_w = params["w_ih"].shape
    H = fourH // 4
    assert E == H == E_w, "stacked-weight layout assumes E == H"
    O = params["w1"].shape[0]

    LANE = 128
    Dp = _round_up(max(E, H), LANE)       # padded input/hidden width (matmul LHS lanes)
    Hb = _round_up(H, 32)                 # per-gate packed lane width (4*Hb % 128 == 0)
    G4 = 4 * Hb                           # packed 4-gate width
    Op = _round_up(O, LANE)
    OUT = LANE                            # lane-dense output, sliced to 1 in the wrapper

    kind = _device_kind()
    two_tc = "v7" in kind                 # v7x: 2 TensorCores per chip
    nb = 2 if (two_tc and B >= 16) else 1
    Bb = _round_up(max(-(-B // nb), 8), 8)  # per-block padded batch (full f32 sublanes)
    Bp = nb * Bb

    # Activations: per-block time-major, zero-padded, bf16 (pure MXU operand).
    x = jnp.transpose(emb, (1, 0, 2)).astype(jnp.float32)              # (T, B, E)
    x = jnp.pad(x, ((0, 0), (0, Bp - B), (0, Dp - E)))                 # (T, Bp, Dp)
    x = x.reshape(T, nb, Bb, Dp).transpose(1, 0, 2, 3)                 # (nb, T, Bb, Dp)
    x = x.reshape(nb * T * Bb, Dp).astype(jnp.bfloat16)

    w_ih = _prep_lstm_w(params["w_ih"], L, H, Hb, Dp)                  # (L, Dp, G4) bf16
    w_hh = _prep_lstm_w(params["w_hh"], L, H, Hb, Dp)                  # (L, Dp, G4) bf16
    b = _prep_lstm_b(params["b_ih"], params["b_hh"], L, H, Hb)         # (L, 1, G4) f32
    w1 = jnp.pad(params["w1"].T, ((0, Dp - H), (0, Op - O))).astype(jnp.bfloat16)    # (Dp, Op)
    b1 = jnp.pad(params["b1"][None, :], ((0, 0), (0, Op - O))).astype(jnp.float32)   # (1, Op)
    w2 = jnp.pad(params["w2"].T, ((0, Op - O), (0, OUT - 1))).astype(jnp.bfloat16)   # (Op, 128)
    b2 = jnp.pad(params["b2"][None, :], ((0, 0), (0, OUT - 1))).astype(jnp.float32)  # (1, 128)

    def _nbytes(shape, itemsize):
        n = 1
        for s in shape:
            n *= int(s)
        return n * itemsize

    weight_bytes = (2 * _nbytes((L, Dp, G4), 2) + _nbytes((L, 1, G4), 4)
                    + _nbytes((Dp, Op), 2) + _nbytes((1, Op), 4)
                    + _nbytes((Op, OUT), 2) + _nbytes((1, OUT), 4))
    stream_bytes = 2 * _nbytes((T * Bb, Dp), 2) + 2 * _nbytes((Bb, OUT), 4)
    scratch_bytes = 2 * _nbytes((T * Bb, G4), 4) + 2 * _nbytes((Bb, G4), 4)
    ceiling = (48 << 20) if two_tc else (100 << 20)      # v7x has 64 MiB VMEM per core
    vmem_limit = int(min(max(2 * (weight_bytes + stream_bytes + scratch_bytes) + (4 << 20),
                             16 << 20), ceiling))

    flops = 4 * L * T * Bp * Dp * G4 + 2 * Bp * Dp * Op + 2 * Bp * Op * OUT
    transcendentals = 3 * L * T * Bp * G4 + Bp * OUT
    bytes_accessed = _nbytes((nb * T * Bb, Dp), 2) + weight_bytes + _nbytes((Bp, OUT), 4)

    def wfull(shape):
        return pl.BlockSpec(shape, lambda bidx: (0,) * len(shape))

    out = pl.pallas_call(
        _lstm_classifier_kernel,
        out_shape=jax.ShapeDtypeStruct((Bp, OUT), jnp.float32),
        grid=(nb,),
        in_specs=[
            pl.BlockSpec((T * Bb, Dp), lambda bidx: (bidx, 0)),   # per-block sequence
            wfull((L, Dp, G4)),
            wfull((L, Dp, G4)),
            wfull((L, 1, G4)),
            wfull((Dp, Op)),
            wfull((1, Op)),
            wfull((Op, OUT)),
            wfull((1, OUT)),
        ],
        out_specs=pl.BlockSpec((Bb, OUT), lambda bidx: (bidx, 0)),
        scratch_shapes=[
            pltpu.VMEM((T * Bb, G4), jnp.float32),   # pre-activations, even layers
            pltpu.VMEM((T * Bb, G4), jnp.float32),   # pre-activations, odd layers
            pltpu.VMEM((Bb, G4), jnp.float32),       # h state (f32)
            pltpu.VMEM((Bb, G4), jnp.float32),       # c state (f32)
        ],
        compiler_params=pltpu.CompilerParams(
            dimension_semantics=("parallel",),
            vmem_limit_bytes=vmem_limit),
        cost_estimate=pl.CostEstimate(flops=int(flops),
                                      transcendentals=int(transcendentals),
                                      bytes_accessed=int(bytes_accessed)),
    )(x, w_ih, w_hh, b, w1, b1, w2, b2)

    # Padded batch rows / lanes develop bounded nonzero state but are sliced away here.
    return out[:B, :1]


def init_params(key, input_size, embed_size, hidden_size, output_size, num_layers):
    assert embed_size == hidden_size, "stacked-weight layout assumes E == H"
    ks = jax.random.split(key, 9)
    s = 0.1
    return {
        "embedding": s * jax.random.normal(ks[0], (input_size, embed_size), jnp.float32),
        "w_ih": s * jax.random.normal(ks[1], (num_layers, 4 * hidden_size, embed_size), jnp.float32),
        "w_hh": s * jax.random.normal(ks[2], (num_layers, 4 * hidden_size, hidden_size), jnp.float32),
        "b_ih": s * jax.random.normal(ks[3], (num_layers, 4 * hidden_size), jnp.float32),
        "b_hh": s * jax.random.normal(ks[4], (num_layers, 4 * hidden_size), jnp.float32),
        "w1": s * jax.random.normal(ks[5], (output_size, hidden_size), jnp.float32),
        "b1": s * jax.random.normal(ks[6], (output_size,), jnp.float32),
        "w2": s * jax.random.normal(ks[7], (1, output_size), jnp.float32),
        "b2": s * jax.random.normal(ks[8], (1,), jnp.float32),
    }


if __name__ == "__main__":
    # small config consistent with the module's forward
    input_size = 50    # vocab
    embed_size = 32
    hidden_size = 32
    output_size = 16
    num_layers = 2
    B, T = 2, 8

    key = jax.random.PRNGKey(0)
    k_tok, k_param = jax.random.split(key)
    params = init_params(k_param, input_size, embed_size, hidden_size,
                         output_size, num_layers)
    token_ids = jax.random.randint(k_tok, (B, T), 0, input_size, dtype=jnp.int32)

    out = lstm_classifier_forward(token_ids, params)
    out = jax.block_until_ready(out)
    assert out.shape == (B, 1) and out.dtype == jnp.float32
    assert bool(jnp.all(jnp.isfinite(out)))
    assert bool(jnp.all((out > 0.0) & (out < 1.0)))
    print("KERNEL_OK")
</pallas_src>

<mosaic_0001>
module attributes {stable_mosaic.version = 11 : i64} {
  func.func @_lstm_classifier_kernel(%arg0: i32, %arg1: memref<64x128xbf16, #tpu.memory_space<vmem>>, %arg2: memref<2x128x128xbf16, #tpu.memory_space<vmem>>, %arg3: memref<2x128x128xbf16, #tpu.memory_space<vmem>>, %arg4: memref<2x1x128xf32, #tpu.memory_space<vmem>>, %arg5: memref<128x128xbf16, #tpu.memory_space<vmem>>, %arg6: memref<1x128xf32, #tpu.memory_space<vmem>>, %arg7: memref<128x128xbf16, #tpu.memory_space<vmem>>, %arg8: memref<1x128xf32, #tpu.memory_space<vmem>>, %arg9: memref<8x128xf32, #tpu.memory_space<vmem>>, %arg10: memref<64x128xf32, #tpu.memory_space<vmem>>, %arg11: memref<64x128xf32, #tpu.memory_space<vmem>>, %arg12: memref<8x128xf32, #tpu.memory_space<vmem>>, %arg13: memref<8x128xf32, #tpu.memory_space<vmem>>) attributes {dimension_semantics = [#tpu.dimension_semantics<parallel>], iteration_bounds = array<i64: 1>, scalar_prefetch = 0 : i64, scratch_operands = 4 : i64, tpu.core_type = #tpu.core_type<tc>, window_params = [{transform_indices = @transform_0, window_bounds = array<i64: 64, 128>}, {pipeline_mode = #tpu.pipeline_mode<synchronous>, transform_indices = @transform_1, window_bounds = array<i64: 2, 128, 128>}, {pipeline_mode = #tpu.pipeline_mode<synchronous>, transform_indices = @transform_2, window_bounds = array<i64: 2, 128, 128>}, {pipeline_mode = #tpu.pipeline_mode<synchronous>, transform_indices = @transform_3, window_bounds = array<i64: 2, 1, 128>}, {pipeline_mode = #tpu.pipeline_mode<synchronous>, transform_indices = @transform_4, window_bounds = array<i64: 128, 128>}, {pipeline_mode = #tpu.pipeline_mode<synchronous>, transform_indices = @transform_5, window_bounds = array<i64: 1, 128>}, {pipeline_mode = #tpu.pipeline_mode<synchronous>, transform_indices = @transform_6, window_bounds = array<i64: 128, 128>}, {pipeline_mode = #tpu.pipeline_mode<synchronous>, transform_indices = @transform_7, window_bounds = array<i64: 1, 128>}, {transform_indices = @transform_8, window_bounds = array<i64: 8, 128>}]} {
    %c0 = arith.constant 0 : index
    %c0_0 = arith.constant 0 : index
    %0 = vector.load %arg1[%c0, %c0_0] : memref<64x128xbf16, #tpu.memory_space<vmem>>, vector<64x128xbf16>
    %c0_1 = arith.constant 0 : index
    %c0_2 = arith.constant 0 : index
    %c0_3 = arith.constant 0 : index
    %1 = vector.load %arg2[%c0_1, %c0_2, %c0_3] : memref<2x128x128xbf16, #tpu.memory_space<vmem>>, vector<1x128x128xbf16>
    %2 = vector.shape_cast %1 : vector<1x128x128xbf16> to vector<128x128xbf16>
    %cst = arith.constant dense<0.000000e+00> : vector<64x128xf32>
    %3 = tpu.matmul %0, %2, %cst {dimension_numbers = #tpu.dot_dimension_numbers<[1], [0], [0], [1], [0, 0, 1, 1], [], []>} : vector<64x128xbf16>, vector<128x128xbf16>, vector<64x128xf32> -> vector<64x128xf32>
    %c0_4 = arith.constant 0 : index
    %c0_5 = arith.constant 0 : index
    %c0_6 = arith.constant 0 : index
    %4 = vector.load %arg4[%c0_4, %c0_5, %c0_6] : memref<2x1x128xf32, #tpu.memory_space<vmem>>, vector<1x1x128xf32>
    %5 = vector.shape_cast %4 : vector<1x1x128xf32> to vector<1x128xf32>
    %6 = vector.broadcast %5 : vector<1x128xf32> to vector<64x128xf32>
    %7 = arith.addf %3, %6 : vector<64x128xf32>
    %c0_7 = arith.constant 0 : index
    %c0_8 = arith.constant 0 : index
    %8 = vector.load %arg10[%c0_7, %c0_8] : memref<64x128xf32, #tpu.memory_space<vmem>>, vector<64x128xf32>
    tpu.vector_store %arg10[%c0_7, %c0_8], %7 {strides = array<i32>} : memref<64x128xf32, #tpu.memory_space<vmem>>, vector<64x128xf32>,
    %c0_9 = arith.constant 0 : index
    %c0_10 = arith.constant 0 : index
    %c0_11 = arith.constant 0 : index
    %9 = vector.load %arg3[%c0_9, %c0_10, %c0_11] : memref<2x128x128xbf16, #tpu.memory_space<vmem>>, vector<1x128x128xbf16>
    %10 = vector.shape_cast %9 : vector<1x128x128xbf16> to vector<128x128xbf16>
    %c1 = arith.constant 1 : index
    %c0_12 = arith.constant 0 : index
    %c0_13 = arith.constant 0 : index
    %11 = vector.load %arg2[%c1, %c0_12, %c0_13] : memref<2x128x128xbf16, #tpu.memory_space<vmem>>, vector<1x128x128xbf16>
    %12 = vector.shape_cast %11 : vector<1x128x128xbf16> to vector<128x128xbf16>
    %c1_14 = arith.constant 1 : index
    %c0_15 = arith.constant 0 : index
    %c0_16 = arith.constant 0 : index
    %13 = vector.load %arg4[%c1_14, %c0_15, %c0_16] : memref<2x1x128xf32, #tpu.memory_space<vmem>>, vector<1x1x128xf32>
    %14 = vector.shape_cast %13 : vector<1x1x128xf32> to vector<1x128xf32>
    %cst_17 = arith.constant 0.000000e+00 : f32
    %15 = vector.broadcast %cst_17 : f32 to vector<8x128xf32>
    %c0_18 = arith.constant 0 : index
    %c0_19 = arith.constant 0 : index
    %16 = vector.load %arg12[%c0_18, %c0_19] : memref<8x128xf32, #tpu.memory_space<vmem>>, vector<8x128xf32>
    tpu.vector_store %arg12[%c0_18, %c0_19], %15 {strides = array<i32>} : memref<8x128xf32, #tpu.memory_space<vmem>>, vector<8x128xf32>,
    %cst_20 = arith.constant 0.000000e+00 : f32
    %17 = vector.broadcast %cst_20 : f32 to vector<8x128xf32>
    %c0_21 = arith.constant 0 : index
    %c0_22 = arith.constant 0 : index
    %18 = vector.load %arg13[%c0_21, %c0_22] : memref<8x128xf32, #tpu.memory_space<vmem>>, vector<8x128xf32>
    tpu.vector_store %arg13[%c0_21, %c0_22], %17 {strides = array<i32>} : memref<8x128xf32, #tpu.memory_space<vmem>>, vector<8x128xf32>,
    %c0_23 = arith.constant 0 : index
    %c0_24 = arith.constant 0 : index
    %19 = vector.load %arg12[%c0_23, %c0_24] : memref<8x128xf32, #tpu.memory_space<vmem>>, vector<8x128xf32>
    %20 = arith.truncf %19 : vector<8x128xf32> to vector<8x128xbf16>
    %c0_25 = arith.constant 0 : index
    %c0_26 = arith.constant 0 : index
    %21 = vector.load %arg10[%c0_25, %c0_26] : memref<64x128xf32, #tpu.memory_space<vmem>>, vector<8x128xf32>
    %cst_27 = arith.constant dense<0.000000e+00> : vector<8x128xf32>
    %22 = tpu.matmul %20, %10, %cst_27 {dimension_numbers = #tpu.dot_dimension_numbers<[1], [0], [0], [1], [0, 0, 1, 1], [], []>} : vector<8x128xbf16>, vector<128x128xbf16>, vector<8x128xf32> -> vector<8x128xf32>
    %23 = arith.addf %21, %22 : vector<8x128xf32>
    %24 = arith.negf %23 : vector<8x128xf32>
    %25 = math.exp %24 : vector<8x128xf32>
    %cst_28 = arith.constant 1.000000e+00 : f32
    %26 = vector.broadcast %cst_28 : f32 to vector<8x128xf32>
    %27 = arith.addf %26, %25 : vector<8x128xf32>
    %28 = arith.divf %26, %27 : vector<8x128xf32>
    %29 = math.tanh %23 : vector<8x128xf32>
    %c96_i32 = arith.constant 96 : i32
    %30 = tpu.dynamic_rotate %28 by %c96_i32 dim 1 : vector<8x128xf32>, i32 -> vector<8x128xf32>
    %c64_i32 = arith.constant 64 : i32
    %31 = tpu.dynamic_rotate %29 by %c64_i32 dim 1 : vector<8x128xf32>, i32 -> vector<8x128xf32>
    %c32_i32 = arith.constant 32 : i32
    %32 = tpu.dynamic_rotate %28 by %c32_i32 dim 1 : vector<8x128xf32>, i32 -> vector<8x128xf32>
    %c0_29 = arith.constant 0 : index
    %c0_30 = arith.constant 0 : index
    %33 = vector.load %arg13[%c0_29, %c0_30] : memref<8x128xf32, #tpu.memory_space<vmem>>, vector<8x128xf32>
    %34 = arith.mulf %30, %33 : vector<8x128xf32>
    %35 = arith.mulf %28, %31 : vector<8x128xf32>
    %36 = arith.addf %34, %35 : vector<8x128xf32>
    %37 = math.tanh %36 : vector<8x128xf32>
    %38 = arith.mulf %32, %37 : vector<8x128xf32>
    %c0_31 = arith.constant 0 : index
    %c0_32 = arith.constant 0 : index
    %39 = vector.load %arg13[%c0_31, %c0_32] : memref<8x128xf32, #tpu.memory_space<vmem>>, vector<8x128xf32>
    tpu.vector_store %arg13[%c0_31, %c0_32], %36 {strides = array<i32>} : memref<8x128xf32, #tpu.memory_space<vmem>>, vector<8x128xf32>,
    %c0_33 = arith.constant 0 : index
    %c0_34 = arith.constant 0 : index
    %40 = vector.load %arg12[%c0_33, %c0_34] : memref<8x128xf32, #tpu.memory_space<vmem>>, vector<8x128xf32>
    tpu.vector_store %arg12[%c0_33, %c0_34], %38 {strides = array<i32>} : memref<8x128xf32, #tpu.memory_space<vmem>>, vector<8x128xf32>,
    %41 = arith.truncf %38 : vector<8x128xf32> to vector<8x128xbf16>
    %cst_35 = arith.constant dense<0.000000e+00> : vector<8x128xf32>
    %42 = tpu.matmul %41, %12, %cst_35 {dimension_numbers = #tpu.dot_dimension_numbers<[1], [0], [0], [1], [0, 0, 1, 1], [], []>} : vector<8x128xbf16>, vector<128x128xbf16>, vector<8x128xf32> -> vector<8x128xf32>
    %43 = vector.broadcast %14 : vector<1x128xf32> to vector<8x128xf32>
    %44 = arith.addf %42, %43 : vector<8x128xf32>
    %c0_36 = arith.constant 0 : index
    %c0_37 = arith.constant 0 : index
    %45 = vector.load %arg11[%c0_36, %c0_37] : memref<64x128xf32, #tpu.memory_space<vmem>>, vector<8x128xf32>
    tpu.vector_store %arg11[%c0_36, %c0_37], %44 {strides = array<i32>} : memref<64x128xf32, #tpu.memory_space<vmem>>, vector<8x128xf32>,
    %c0_38 = arith.constant 0 : index
    %c0_39 = arith.constant 0 : index
    %46 = vector.load %arg12[%c0_38, %c0_39] : memref<8x128xf32, #tpu.memory_space<vmem>>, vector<8x128xf32>
    %47 = arith.truncf %46 : vector<8x128xf32> to vector<8x128xbf16>
    %c8 = arith.constant 8 : index
    %c0_40 = arith.constant 0 : index
    %48 = vector.load %arg10[%c8, %c0_40] : memref<64x128xf32, #tpu.memory_space<vmem>>, vector<8x128xf32>
    %cst_41 = arith.constant dense<0.000000e+00> : vector<8x128xf32>
    %49 = tpu.matmul %47, %10, %cst_41 {dimension_numbers = #tpu.dot_dimension_numbers<[1], [0], [0], [1], [0, 0, 1, 1], [], []>} : vector<8x128xbf16>, vector<128x128xbf16>, vector<8x128xf32> -> vector<8x128xf32>
    %50 = arith.addf %48, %49 : vector<8x128xf32>
    %51 = arith.negf %50 : vector<8x128xf32>
    %52 = math.exp %51 : vector<8x128xf32>
    %cst_42 = arith.constant 1.000000e+00 : f32
    %53 = vector.broadcast %cst_42 : f32 to vector<8x128xf32>
    %54 = arith.addf %53, %52 : vector<8x128xf32>
    %55 = arith.divf %53, %54 : vector<8x128xf32>
    %56 = math.tanh %50 : vector<8x128xf32>
    %c96_i32_43 = arith.constant 96 : i32
    %57 = tpu.dynamic_rotate %55 by %c96_i32_43 dim 1 : vector<8x128xf32>, i32 -> vector<8x128xf32>
    %c64_i32_44 = arith.constant 64 : i32
    %58 = tpu.dynamic_rotate %56 by %c64_i32_44 dim 1 : vector<8x128xf32>, i32 -> vector<8x128xf32>
    %c32_i32_45 = arith.constant 32 : i32
    %59 = tpu.dynamic_rotate %55 by %c32_i32_45 dim 1 : vector<8x128xf32>, i32 -> vector<8x128xf32>
    %c0_46 = arith.constant 0 : index
    %c0_47 = arith.constant 0 : index
    %60 = vector.load %arg13[%c0_46, %c0_47] : memref<8x128xf32, #tpu.memory_space<vmem>>, vector<8x128xf32>
    %61 = arith.mulf %57, %60 : vector<8x128xf32>
    %62 = arith.mulf %55, %58 : vector<8x128xf32>
    %63 = arith.addf %61, %62 : vector<8x128xf32>
    %64 = math.tanh %63 : vector<8x128xf32>
    %65 = arith.mulf %59, %64 : vector<8x128xf32>
    %c0_48 = arith.constant 0 : index
    %c0_49 = arith.constant 0 : index
    %66 = vector.load %arg13[%c0_48, %c0_49] : memref<8x128xf32, #tpu.memory_space<vmem>>, vector<8x128xf32>
    tpu.vector_store %arg13[%c0_48, %c0_49], %63 {strides = array<i32>} : memref<8x128xf32, #tpu.memory_space<vmem>>, vector<8x128xf32>,
    %c0_50 = arith.constant 0 : index
    %c0_51 = arith.constant 0 : index
    %67 = vector.load %arg12[%c0_50, %c0_51] : memref<8x128xf32, #tpu.memory_space<vmem>>, vector<8x128xf32>
    tpu.vector_store %arg12[%c0_50, %c0_51], %65 {strides = array<i32>} : memref<8x128xf32, #tpu.memory_space<vmem>>, vector<8x128xf32>,
    %68 = arith.truncf %65 : vector<8x128xf32> to vector<8x128xbf16>
    %cst_52 = arith.constant dense<0.000000e+00> : vector<8x128xf32>
    %69 = tpu.matmul %68, %12, %cst_52 {dimension_numbers = #tpu.dot_dimension_numbers<[1], [0], [0], [1], [0, 0, 1, 1], [], []>} : vector<8x128xbf16>, vector<128x128xbf16>, vector<8x128xf32> -> vector<8x128xf32>
    %70 = vector.broadcast %14 : vector<1x128xf32> to vector<8x128xf32>
    %71 = arith.addf %69, %70 : vector<8x128xf32>
    %c8_53 = arith.constant 8 : index
    %c0_54 = arith.constant 0 : index
    %72 = vector.load %arg11[%c8_53, %c0_54] : memref<64x128xf32, #tpu.memory_space<vmem>>, vector<8x128xf32>
    tpu.vector_store %arg11[%c8_53, %c0_54], %71 {strides = array<i32>} : memref<64x128xf32, #tpu.memory_space<vmem>>, vector<8x128xf32>,
    %c0_55 = arith.constant 0 : index
    %c0_56 = arith.constant 0 : index
    %73 = vector.load %arg12[%c0_55, %c0_56] : memref<8x128xf32, #tpu.memory_space<vmem>>, vector<8x128xf32>
    %74 = arith.truncf %73 : vector<8x128xf32> to vector<8x128xbf16>
    %c16 = arith.constant 16 : index
    %c0_57 = arith.constant 0 : index
    %75 = vector.load %arg10[%c16, %c0_57] : memref<64x128xf32, #tpu.memory_space<vmem>>, vector<8x128xf32>
    %cst_58 = arith.constant dense<0.000000e+00> : vector<8x128xf32>
    %76 = tpu.matmul %74, %10, %cst_58 {dimension_numbers = #tpu.dot_dimension_numbers<[1], [0], [0], [1], [0, 0, 1, 1], [], []>} : vector<8x128xbf16>, vector<128x128xbf16>, vector<8x128xf32> -> vector<8x128xf32>
    %77 = arith.addf %75, %76 : vector<8x128xf32>
    %78 = arith.negf %77 : vector<8x128xf32>
    %79 = math.exp %78 : vector<8x128xf32>
    %cst_59 = arith.constant 1.000000e+00 : f32
    %80 = vector.broadcast %cst_59 : f32 to vector<8x128xf32>
    %81 = arith.addf %80, %79 : vector<8x128xf32>
    %82 = arith.divf %80, %81 : vector<8x128xf32>
    %83 = math.tanh %77 : vector<8x128xf32>
    %c96_i32_60 = arith.constant 96 : i32
    %84 = tpu.dynamic_rotate %82 by %c96_i32_60 dim 1 : vector<8x128xf32>, i32 -> vector<8x128xf32>
    %c64_i32_61 = arith.constant 64 : i32
    %85 = tpu.dynamic_rotate %83 by %c64_i32_61 dim 1 : vector<8x128xf32>, i32 -> vector<8x128xf32>
    %c32_i32_62 = arith.constant 32 : i32
    %86 = tpu.dynamic_rotate %82 by %c32_i32_62 dim 1 : vector<8x128xf32>, i32 -> vector<8x128xf32>
    %c0_63 = arith.constant 0 : index
    %c0_64 = arith.constant 0 : index
    %87 = vector.load %arg13[%c0_63, %c0_64] : memref<8x128xf32, #tpu.memory_space<vmem>>, vector<8x128xf32>
    %88 = arith.mulf %84, %87 : vector<8x128xf32>
    %89 = arith.mulf %82, %85 : vector<8x128xf32>
    %90 = arith.addf %88, %89 : vector<8x128xf32>
    %91 = math.tanh %90 : vector<8x128xf32>
    %92 = arith.mulf %86, %91 : vector<8x128xf32>
    %c0_65 = arith.constant 0 : index
    %c0_66 = arith.constant 0 : index
    %93 = vector.load %arg13[%c0_65, %c0_66] : memref<8x128xf32, #tpu.memory_space<vmem>>, vector<8x128xf32>
    tpu.vector_store %arg13[%c0_65, %c0_66], %90 {strides = array<i32>} : memref<8x128xf32, #tpu.memory_space<vmem>>, vector<8x128xf32>,
    %c0_67 = arith.constant 0 : index
    %c0_68 = arith.constant 0 : index
    %94 = vector.load %arg12[%c0_67, %c0_68] : memref<8x128xf32, #tpu.memory_space<vmem>>, vector<8x128xf32>
    tpu.vector_store %arg12[%c0_67, %c0_68], %92 {strides = array<i32>} : memref<8x128xf32, #tpu.memory_space<vmem>>, vector<8x128xf32>,
    %95 = arith.truncf %92 : vector<8x128xf32> to vector<8x128xbf16>
    %cst_69 = arith.constant dense<0.000000e+00> : vector<8x128xf32>
    %96 = tpu.matmul %95, %12, %cst_69 {dimension_numbers = #tpu.dot_dimension_numbers<[1], [0], [0], [1], [0, 0, 1, 1], [], []>} : vector<8x128xbf16>, vector<128x128xbf16>, vector<8x128xf32> -> vector<8x128xf32>
    %97 = vector.broadcast %14 : vector<1x128xf32> to vector<8x128xf32>
    %98 = arith.addf %96, %97 : vector<8x128xf32>
    %c16_70 = arith.constant 16 : index
    %c0_71 = arith.constant 0 : index
    %99 = vector.load %arg11[%c16_70, %c0_71] : memref<64x128xf32, #tpu.memory_space<vmem>>, vector<8x128xf32>
    tpu.vector_store %arg11[%c16_70, %c0_71], %98 {strides = array<i32>} : memref<64x128xf32, #tpu.memory_space<vmem>>, vector<8x128xf32>,
    %c0_72 = arith.constant 0 : index
    %c0_73 = arith.constant 0 : index
    %100 = vector.load %arg12[%c0_72, %c0_73] : memref<8x128xf32, #tpu.memory_space<vmem>>, vector<8x128xf32>
    %101 = arith.truncf %100 : vector<8x128xf32> to vector<8x128xbf16>
    %c24 = arith.constant 24 : index
    %c0_74 = arith.constant 0 : index
    %102 = vector.load %arg10[%c24, %c0_74] : memref<64x128xf32, #tpu.memory_space<vmem>>, vector<8x128xf32>
    %cst_75 = arith.constant dense<0.000000e+00> : vector<8x128xf32>
    %103 = tpu.matmul %101, %10, %cst_75 {dimension_numbers = #tpu.dot_dimension_numbers<[1], [0], [0], [1], [0, 0, 1, 1], [], []>} : vector<8x128xbf16>, vector<128x128xbf16>, vector<8x128xf32> -> vector<8x128xf32>
    %104 = arith.addf %102, %103 : vector<8x128xf32>
    %105 = arith.negf %104 : vector<8x128xf32>
    %106 = math.exp %105 : vector<8x128xf32>
    %cst_76 = arith.constant 1.000000e+00 : f32
    %107 = vector.broadcast %cst_76 : f32 to vector<8x128xf32>
    %108 = arith.addf %107, %106 : vector<8x128xf32>
    %109 = arith.divf %107, %108 : vector<8x128xf32>
    %110 = math.tanh %104 : vector<8x128xf32>
    %c96_i32_77 = arith.constant 96 : i32
    %111 = tpu.dynamic_rotate %109 by %c96_i32_77 dim 1 : vector<8x128xf32>, i32 -> vector<8x128xf32>
    %c64_i32_78 = arith.constant 64 : i32
    %112 = tpu.dynamic_rotate %110 by %c64_i32_78 dim 1 : vector<8x128xf32>, i32 -> vector<8x128xf32>
    %c32_i32_79 = arith.constant 32 : i32
    %113 = tpu.dynamic_rotate %109 by %c32_i32_79 dim 1 : vector<8x128xf32>, i32 -> vector<8x128xf32>
    %c0_80 = arith.constant 0 : index
    %c0_81 = arith.constant 0 : index
    %114 = vector.load %arg13[%c0_80, %c0_81] : memref<8x128xf32, #tpu.memory_space<vmem>>, vector<8x128xf32>
    %115 = arith.mulf %111, %114 : vector<8x128xf32>
    %116 = arith.mulf %109, %112 : vector<8x128xf32>
    %117 = arith.addf %115, %116 : vector<8x128xf32>
    %118 = math.tanh %117 : vector<8x128xf32>
    %119 = arith.mulf %113, %118 : vector<8x128xf32>
    %c0_82 = arith.constant 0 : index
    %c0_83 = arith.constant 0 : index
    %120 = vector.load %arg13[%c0_82, %c0_83] : memref<8x128xf32, #tpu.memory_space<vmem>>, vector<8x128xf32>
    tpu.vector_store %arg13[%c0_82, %c0_83], %117 {strides = array<i32>} : memref<8x128xf32, #tpu.memory_space<vmem>>, vector<8x128xf32>,
    %c0_84 = arith.constant 0 : index
    %c0_85 = arith.constant 0 : index
    %121 = vector.load %arg12[%c0_84, %c0_85] : memref<8x128xf32, #tpu.memory_space<vmem>>, vector<8x128xf32>
    tpu.vector_store %arg12[%c0_84, %c0_85], %119 {strides = array<i32>} : memref<8x128xf32, #tpu.memory_space<vmem>>, vector<8x128xf32>,
    %122 = arith.truncf %119 : vector<8x128xf32> to vector<8x128xbf16>
    %cst_86 = arith.constant dense<0.000000e+00> : vector<8x128xf32>
    %123 = tpu.matmul %122, %12, %cst_86 {dimension_numbers = #tpu.dot_dimension_numbers<[1], [0], [0], [1], [0, 0, 1, 1], [], []>} : vector<8x128xbf16>, vector<128x128xbf16>, vector<8x128xf32> -> vector<8x128xf32>
    %124 = vector.broadcast %14 : vector<1x128xf32> to vector<8x128xf32>
    %125 = arith.addf %123, %124 : vector<8x128xf32>
    %c24_87 = arith.constant 24 : index
    %c0_88 = arith.constant 0 : index
    %126 = vector.load %arg11[%c24_87, %c0_88] : memref<64x128xf32, #tpu.memory_space<vmem>>, vector<8x128xf32>
    tpu.vector_store %arg11[%c24_87, %c0_88], %125 {strides = array<i32>} : memref<64x128xf32, #tpu.memory_space<vmem>>, vector<8x128xf32>,
    %c0_89 = arith.constant 0 : index
    %c0_90 = arith.constant 0 : index
    %127 = vector.load %arg12[%c0_89, %c0_90] : memref<8x128xf32, #tpu.memory_space<vmem>>, vector<8x128xf32>
    %128 = arith.truncf %127 : vector<8x128xf32> to vector<8x128xbf16>
    %c32 = arith.constant 32 : index
    %c0_91 = arith.constant 0 : index
    %129 = vector.load %arg10[%c32, %c0_91] : memref<64x128xf32, #tpu.memory_space<vmem>>, vector<8x128xf32>
    %cst_92 = arith.constant dense<0.000000e+00> : vector<8x128xf32>
    %130 = tpu.matmul %128, %10, %cst_92 {dimension_numbers = #tpu.dot_dimension_numbers<[1], [0], [0], [1], [0, 0, 1, 1], [], []>} : vector<8x128xbf16>, vector<128x128xbf16>, vector<8x128xf32> -> vector<8x128xf32>
    %131 = arith.addf %129, %130 : vector<8x128xf32>
    %132 = arith.negf %131 : vector<8x128xf32>
    %133 = math.exp %132 : vector<8x128xf32>
    %cst_93 = arith.constant 1.000000e+00 : f32
    %134 = vector.broadcast %cst_93 : f32 to vector<8x128xf32>
    %135 = arith.addf %134, %133 : vector<8x128xf32>
    %136 = arith.divf %134, %135 : vector<8x128xf32>
    %137 = math.tanh %131 : vector<8x128xf32>
    %c96_i32_94 = arith.constant 96 : i32
    %138 = tpu.dynamic_rotate %136 by %c96_i32_94 dim 1 : vector<8x128xf32>, i32 -> vector<8x128xf32>
    %c64_i32_95 = arith.constant 64 : i32
    %139 = tpu.dynamic_rotate %137 by %c64_i32_95 dim 1 : vector<8x128xf32>, i32 -> vector<8x128xf32>
    %c32_i32_96 = arith.constant 32 : i32
    %140 = tpu.dynamic_rotate %136 by %c32_i32_96 dim 1 : vector<8x128xf32>, i32 -> vector<8x128xf32>
    %c0_97 = arith.constant 0 : index
    %c0_98 = arith.constant 0 : index
    %141 = vector.load %arg13[%c0_97, %c0_98] : memref<8x128xf32, #tpu.memory_space<vmem>>, vector<8x128xf32>
    %142 = arith.mulf %138, %141 : vector<8x128xf32>
    %143 = arith.mulf %136, %139 : vector<8x128xf32>
    %144 = arith.addf %142, %143 : vector<8x128xf32>
    %145 = math.tanh %144 : vector<8x128xf32>
    %146 = arith.mulf %140, %145 : vector<8x128xf32>
    %c0_99 = arith.constant 0 : index
    %c0_100 = arith.constant 0 : index
    %147 = vector.load %arg13[%c0_99, %c0_100] : memref<8x128xf32, #tpu.memory_space<vmem>>, vector<8x128xf32>
    tpu.vector_store %arg13[%c0_99, %c0_100], %144 {strides = array<i32>} : memref<8x128xf32, #tpu.memory_space<vmem>>, vector<8x128xf32>,
    %c0_101 = arith.constant 0 : index
    %c0_102 = arith.constant 0 : index
    %148 = vector.load %arg12[%c0_101, %c0_102] : memref<8x128xf32, #tpu.memory_space<vmem>>, vector<8x128xf32>
    tpu.vector_store %arg12[%c0_101, %c0_102], %146 {strides = array<i32>} : memref<8x128xf32, #tpu.memory_space<vmem>>, vector<8x128xf32>,
    %149 = arith.truncf %146 : vector<8x128xf32> to vector<8x128xbf16>
    %cst_103 = arith.constant dense<0.000000e+00> : vector<8x128xf32>
    %150 = tpu.matmul %149, %12, %cst_103 {dimension_numbers = #tpu.dot_dimension_numbers<[1], [0], [0], [1], [0, 0, 1, 1], [], []>} : vector<8x128xbf16>, vector<128x128xbf16>, vector<8x128xf32> -> vector<8x128xf32>
    %151 = vector.broadcast %14 : vector<1x128xf32> to vector<8x128xf32>
    %152 = arith.addf %150, %151 : vector<8x128xf32>
    %c32_104 = arith.constant 32 : index
    %c0_105 = arith.constant 0 : index
    %153 = vector.load %arg11[%c32_104, %c0_105] : memref<64x128xf32, #tpu.memory_space<vmem>>, vector<8x128xf32>
    tpu.vector_store %arg11[%c32_104, %c0_105], %152 {strides = array<i32>} : memref<64x128xf32, #tpu.memory_space<vmem>>, vector<8x128xf32>,
    %c0_106 = arith.constant 0 : index
    %c0_107 = arith.constant 0 : index
    %154 = vector.load %arg12[%c0_106, %c0_107] : memref<8x128xf32, #tpu.memory_space<vmem>>, vector<8x128xf32>
    %155 = arith.truncf %154 : vector<8x128xf32> to vector<8x128xbf16>
    %c40 = arith.constant 40 : index
    %c0_108 = arith.constant 0 : index
    %156 = vector.load %arg10[%c40, %c0_108] : memref<64x128xf32, #tpu.memory_space<vmem>>, vector<8x128xf32>
    %cst_109 = arith.constant dense<0.000000e+00> : vector<8x128xf32>
    %157 = tpu.matmul %155, %10, %cst_109 {dimension_numbers = #tpu.dot_dimension_numbers<[1], [0], [0], [1], [0, 0, 1, 1], [], []>} : vector<8x128xbf16>, vector<128x128xbf16>, vector<8x128xf32> -> vector<8x128xf32>
    %158 = arith.addf %156, %157 : vector<8x128xf32>
    %159 = arith.negf %158 : vector<8x128xf32>
    %160 = math.exp %159 : vector<8x128xf32>
    %cst_110 = arith.constant 1.000000e+00 : f32
    %161 = vector.broadcast %cst_110 : f32 to vector<8x128xf32>
    %162 = arith.addf %161, %160 : vector<8x128xf32>
    %163 = arith.divf %161, %162 : vector<8x128xf32>
    %164 = math.tanh %158 : vector<8x128xf32>
    %c96_i32_111 = arith.constant 96 : i32
    %165 = tpu.dynamic_rotate %163 by %c96_i32_111 dim 1 : vector<8x128xf32>, i32 -> vector<8x128xf32>
    %c64_i32_112 = arith.constant 64 : i32
    %166 = tpu.dynamic_rotate %164 by %c64_i32_112 dim 1 : vector<8x128xf32>, i32 -> vector<8x128xf32>
    %c32_i32_113 = arith.constant 32 : i32
    %167 = tpu.dynamic_rotate %163 by %c32_i32_113 dim 1 : vector<8x128xf32>, i32 -> vector<8x128xf32>
    %c0_114 = arith.constant 0 : index
    %c0_115 = arith.constant 0 : index
    %168 = vector.load %arg13[%c0_114, %c0_115] : memref<8x128xf32, #tpu.memory_space<vmem>>, vector<8x128xf32>
    %169 = arith.mulf %165, %168 : vector<8x128xf32>
    %170 = arith.mulf %163, %166 : vector<8x128xf32>
    %171 = arith.addf %169, %170 : vector<8x128xf32>
    %172 = math.tanh %171 : vector<8x128xf32>
    %173 = arith.mulf %167, %172 : vector<8x128xf32>
    %c0_116 = arith.constant 0 : index
    %c0_117 = arith.constant 0 : index
    %174 = vector.load %arg13[%c0_116, %c0_117] : memref<8x128xf32, #tpu.memory_space<vmem>>, vector<8x128xf32>
    tpu.vector_store %arg13[%c0_116, %c0_117], %171 {strides = array<i32>} : memref<8x128xf32, #tpu.memory_space<vmem>>, vector<8x128xf32>,
    %c0_118 = arith.constant 0 : index
    %c0_119 = arith.constant 0 : index
    %175 = vector.load %arg12[%c0_118, %c0_119] : memref<8x128xf32, #tpu.memory_space<vmem>>, vector<8x128xf32>
    tpu.vector_store %arg12[%c0_118, %c0_119], %173 {strides = array<i32>} : memref<8x128xf32, #tpu.memory_space<vmem>>, vector<8x128xf32>,
    %176 = arith.truncf %173 : vector<8x128xf32> to vector<8x128xbf16>
    %cst_120 = arith.constant dense<0.000000e+00> : vector<8x128xf32>
    %177 = tpu.matmul %176, %12, %cst_120 {dimension_numbers = #tpu.dot_dimension_numbers<[1], [0], [0], [1], [0, 0, 1, 1], [], []>} : vector<8x128xbf16>, vector<128x128xbf16>, vector<8x128xf32> -> vector<8x128xf32>
    %178 = vector.broadcast %14 : vector<1x128xf32> to vector<8x128xf32>
    %179 = arith.addf %177, %178 : vector<8x128xf32>
    %c40_121 = arith.constant 40 : index
    %c0_122 = arith.constant 0 : index
    %180 = vector.load %arg11[%c40_121, %c0_122] : memref<64x128xf32, #tpu.memory_space<vmem>>, vector<8x128xf32>
    tpu.vector_store %arg11[%c40_121, %c0_122], %179 {strides = array<i32>} : memref<64x128xf32, #tpu.memory_space<vmem>>, vector<8x128xf32>,
    %c0_123 = arith.constant 0 : index
    %c0_124 = arith.constant 0 : index
    %181 = vector.load %arg12[%c0_123, %c0_124] : memref<8x128xf32, #tpu.memory_space<vmem>>, vector<8x128xf32>
    %182 = arith.truncf %181 : vector<8x128xf32> to vector<8x128xbf16>
    %c48 = arith.constant 48 : index
    %c0_125 = arith.constant 0 : index
    %183 = vector.load %arg10[%c48, %c0_125] : memref<64x128xf32, #tpu.memory_space<vmem>>, vector<8x128xf32>
    %cst_126 = arith.constant dense<0.000000e+00> : vector<8x128xf32>
    %184 = tpu.matmul %182, %10, %cst_126 {dimension_numbers = #tpu.dot_dimension_numbers<[1], [0], [0], [1], [0, 0, 1, 1], [], []>} : vector<8x128xbf16>, vector<128x128xbf16>, vector<8x128xf32> -> vector<8x128xf32>
    %185 = arith.addf %183, %184 : vector<8x128xf32>
    %186 = arith.negf %185 : vector<8x128xf32>
    %187 = math.exp %186 : vector<8x128xf32>
    %cst_127 = arith.constant 1.000000e+00 : f32
    %188 = vector.broadcast %cst_127 : f32 to vector<8x128xf32>
    %189 = arith.addf %188, %187 : vector<8x128xf32>
    %190 = arith.divf %188, %189 : vector<8x128xf32>
    %191 = math.tanh %185 : vector<8x128xf32>
    %c96_i32_128 = arith.constant 96 : i32
    %192 = tpu.dynamic_rotate %190 by %c96_i32_128 dim 1 : vector<8x128xf32>, i32 -> vector<8x128xf32>
    %c64_i32_129 = arith.constant 64 : i32
    %193 = tpu.dynamic_rotate %191 by %c64_i32_129 dim 1 : vector<8x128xf32>, i32 -> vector<8x128xf32>
    %c32_i32_130 = arith.constant 32 : i32
    %194 = tpu.dynamic_rotate %190 by %c32_i32_130 dim 1 : vector<8x128xf32>, i32 -> vector<8x128xf32>
    %c0_131 = arith.constant 0 : index
    %c0_132 = arith.constant 0 : index
    %195 = vector.load %arg13[%c0_131, %c0_132] : memref<8x128xf32, #tpu.memory_space<vmem>>, vector<8x128xf32>
    %196 = arith.mulf %192, %195 : vector<8x128xf32>
    %197 = arith.mulf %190, %193 : vector<8x128xf32>
    %198 = arith.addf %196, %197 : vector<8x128xf32>
    %199 = math.tanh %198 : vector<8x128xf32>
    %200 = arith.mulf %194, %199 : vector<8x128xf32>
    %c0_133 = arith.constant 0 : index
    %c0_134 = arith.constant 0 : index
    %201 = vector.load %arg13[%c0_133, %c0_134] : memref<8x128xf32, #tpu.memory_space<vmem>>, vector<8x128xf32>
    tpu.vector_store %arg13[%c0_133, %c0_134], %198 {strides = array<i32>} : memref<8x128xf32, #tpu.memory_space<vmem>>, vector<8x128xf32>,
    %c0_135 = arith.constant 0 : index
    %c0_136 = arith.constant 0 : index
    %202 = vector.load %arg12[%c0_135, %c0_136] : memref<8x128xf32, #tpu.memory_space<vmem>>, vector<8x128xf32>
    tpu.vector_store %arg12[%c0_135, %c0_136], %200 {strides = array<i32>} : memref<8x128xf32, #tpu.memory_space<vmem>>, vector<8x128xf32>,
    %203 = arith.truncf %200 : vector<8x128xf32> to vector<8x128xbf16>
    %cst_137 = arith.constant dense<0.000000e+00> : vector<8x128xf32>
    %204 = tpu.matmul %203, %12, %cst_137 {dimension_numbers = #tpu.dot_dimension_numbers<[1], [0], [0], [1], [0, 0, 1, 1], [], []>} : vector<8x128xbf16>, vector<128x128xbf16>, vector<8x128xf32> -> vector<8x128xf32>
    %205 = vector.broadcast %14 : vector<1x128xf32> to vector<8x128xf32>
    %206 = arith.addf %204, %205 : vector<8x128xf32>
    %c48_138 = arith.constant 48 : index
    %c0_139 = arith.constant 0 : index
    %207 = vector.load %arg11[%c48_138, %c0_139] : memref<64x128xf32, #tpu.memory_space<vmem>>, vector<8x128xf32>
    tpu.vector_store %arg11[%c48_138, %c0_139], %206 {strides = array<i32>} : memref<64x128xf32, #tpu.memory_space<vmem>>, vector<8x128xf32>,
    %c0_140 = arith.constant 0 : index
    %c0_141 = arith.constant 0 : index
    %208 = vector.load %arg12[%c0_140, %c0_141] : memref<8x128xf32, #tpu.memory_space<vmem>>, vector<8x128xf32>
    %209 = arith.truncf %208 : vector<8x128xf32> to vector<8x128xbf16>
    %c56 = arith.constant 56 : index
    %c0_142 = arith.constant 0 : index
    %210 = vector.load %arg10[%c56, %c0_142] : memref<64x128xf32, #tpu.memory_space<vmem>>, vector<8x128xf32>
    %cst_143 = arith.constant dense<0.000000e+00> : vector<8x128xf32>
    %211 = tpu.matmul %209, %10, %cst_143 {dimension_numbers = #tpu.dot_dimension_numbers<[1], [0], [0], [1], [0, 0, 1, 1], [], []>} : vector<8x128xbf16>, vector<128x128xbf16>, vector<8x128xf32> -> vector<8x128xf32>
    %212 = arith.addf %210, %211 : vector<8x128xf32>
    %213 = arith.negf %212 : vector<8x128xf32>
    %214 = math.exp %213 : vector<8x128xf32>
    %cst_144 = arith.constant 1.000000e+00 : f32
    %215 = vector.broadcast %cst_144 : f32 to vector<8x128xf32>
    %216 = arith.addf %215, %214 : vector<8x128xf32>
    %217 = arith.divf %215, %216 : vector<8x128xf32>
    %218 = math.tanh %212 : vector<8x128xf32>
    %c96_i32_145 = arith.constant 96 : i32
    %219 = tpu.dynamic_rotate %217 by %c96_i32_145 dim 1 : vector<8x128xf32>, i32 -> vector<8x128xf32>
    %c64_i32_146 = arith.constant 64 : i32
    %220 = tpu.dynamic_rotate %218 by %c64_i32_146 dim 1 : vector<8x128xf32>, i32 -> vector<8x128xf32>
    %c32_i32_147 = arith.constant 32 : i32
    %221 = tpu.dynamic_rotate %217 by %c32_i32_147 dim 1 : vector<8x128xf32>, i32 -> vector<8x128xf32>
    %c0_148 = arith.constant 0 : index
    %c0_149 = arith.constant 0 : index
    %222 = vector.load %arg13[%c0_148, %c0_149] : memref<8x128xf32, #tpu.memory_space<vmem>>, vector<8x128xf32>
    %223 = arith.mulf %219, %222 : vector<8x128xf32>
    %224 = arith.mulf %217, %220 : vector<8x128xf32>
    %225 = arith.addf %223, %224 : vector<8x128xf32>
    %226 = math.tanh %225 : vector<8x128xf32>
    %227 = arith.mulf %221, %226 : vector<8x128xf32>
    %c0_150 = arith.constant 0 : index
    %c0_151 = arith.constant 0 : index
    %228 = vector.load %arg13[%c0_150, %c0_151] : memref<8x128xf32, #tpu.memory_space<vmem>>, vector<8x128xf32>
    tpu.vector_store %arg13[%c0_150, %c0_151], %225 {strides = array<i32>} : memref<8x128xf32, #tpu.memory_space<vmem>>, vector<8x128xf32>,
    %c0_152 = arith.constant 0 : index
    %c0_153 = arith.constant 0 : index
    %229 = vector.load %arg12[%c0_152, %c0_153] : memref<8x128xf32, #tpu.memory_space<vmem>>, vector<8x128xf32>
    tpu.vector_store %arg12[%c0_152, %c0_153], %227 {strides = array<i32>} : memref<8x128xf32, #tpu.memory_space<vmem>>, vector<8x128xf32>,
    %230 = arith.truncf %227 : vector<8x128xf32> to vector<8x128xbf16>
    %cst_154 = arith.constant dense<0.000000e+00> : vector<8x128xf32>
    %231 = tpu.matmul %230, %12, %cst_154 {dimension_numbers = #tpu.dot_dimension_numbers<[1], [0], [0], [1], [0, 0, 1, 1], [], []>} : vector<8x128xbf16>, vector<128x128xbf16>, vector<8x128xf32> -> vector<8x128xf32>
    %232 = vector.broadcast %14 : vector<1x128xf32> to vector<8x128xf32>
    %233 = arith.addf %231, %232 : vector<8x128xf32>
    %c56_155 = arith.constant 56 : index
    %c0_156 = arith.constant 0 : index
    %234 = vector.load %arg11[%c56_155, %c0_156] : memref<64x128xf32, #tpu.memory_space<vmem>>, vector<8x128xf32>
    tpu.vector_store %arg11[%c56_155, %c0_156], %233 {strides = array<i32>} : memref<64x128xf32, #tpu.memory_space<vmem>>, vector<8x128xf32>,
    %c1_157 = arith.constant 1 : index
    %c0_158 = arith.constant 0 : index
    %c0_159 = arith.constant 0 : index
    %235 = vector.load %arg3[%c1_157, %c0_158, %c0_159] : memref<2x128x128xbf16, #tpu.memory_space<vmem>>, vector<1x128x128xbf16>
    %236 = vector.shape_cast %235 : vector<1x128x128xbf16> to vector<128x128xbf16>
    %cst_160 = arith.constant 0.000000e+00 : f32
    %237 = vector.broadcast %cst_160 : f32 to vector<8x128xf32>
    %c0_161 = arith.constant 0 : index
    %c0_162 = arith.constant 0 : index
    %238 = vector.load %arg12[%c0_161, %c0_162] : memref<8x128xf32, #tpu.memory_space<vmem>>, vector<8x128xf32>
    tpu.vector_store %arg12[%c0_161, %c0_162], %237 {strides = array<i32>} : memref<8x128xf32, #tpu.memory_space<vmem>>, vector<8x128xf32>,
    %cst_163 = arith.constant 0.000000e+00 : f32
    %239 = vector.broadcast %cst_163 : f32 to vector<8x128xf32>
    %c0_164 = arith.constant 0 : index
    %c0_165 = arith.constant 0 : index
    %240 = vector.load %arg13[%c0_164, %c0_165] : memref<8x128xf32, #tpu.memory_space<vmem>>, vector<8x128xf32>
    tpu.vector_store %arg13[%c0_164, %c0_165], %239 {strides = array<i32>} : memref<8x128xf32, #tpu.memory_space<vmem>>, vector<8x128xf32>,
    %c0_166 = arith.constant 0 : index
    %c0_167 = arith.constant 0 : index
    %241 = vector.load %arg12[%c0_166, %c0_167] : memref<8x128xf32, #tpu.memory_space<vmem>>, vector<8x128xf32>
    %242 = arith.truncf %241 : vector<8x128xf32> to vector<8x128xbf16>
    %c0_168 = arith.constant 0 : index
    %c0_169 = arith.constant 0 : index
    %243 = vector.load %arg11[%c0_168, %c0_169] : memref<64x128xf32, #tpu.memory_space<vmem>>, vector<8x128xf32>
    %cst_170 = arith.constant dense<0.000000e+00> : vector<8x128xf32>
    %244 = tpu.matmul %242, %236, %cst_170 {dimension_numbers = #tpu.dot_dimension_numbers<[1], [0], [0], [1], [0, 0, 1, 1], [], []>} : vector<8x128xbf16>, vector<128x128xbf16>, vector<8x128xf32> -> vector<8x128xf32>
    %245 = arith.addf %243, %244 : vector<8x128xf32>
    %246 = arith.negf %245 : vector<8x128xf32>
    %247 = math.exp %246 : vector<8x128xf32>
    %cst_171 = arith.constant 1.000000e+00 : f32
    %248 = vector.broadcast %cst_171 : f32 to vector<8x128xf32>
    %249 = arith.addf %248, %247 : vector<8x128xf32>
    %250 = arith.divf %248, %249 : vector<8x128xf32>
    %251 = math.tanh %245 : vector<8x128xf32>
    %c96_i32_172 = arith.constant 96 : i32
    %252 = tpu.dynamic_rotate %250 by %c96_i32_172 dim 1 : vector<8x128xf32>, i32 -> vector<8x128xf32>
    %c64_i32_173 = arith.constant 64 : i32
    %253 = tpu.dynamic_rotate %251 by %c64_i32_173 dim 1 : vector<8x128xf32>, i32 -> vector<8x128xf32>
    %c32_i32_174 = arith.constant 32 : i32
    %254 = tpu.dynamic_rotate %250 by %c32_i32_174 dim 1 : vector<8x128xf32>, i32 -> vector<8x128xf32>
    %c0_175 = arith.constant 0 : index
    %c0_176 = arith.constant 0 : index
    %255 = vector.load %arg13[%c0_175, %c0_176] : memref<8x128xf32, #tpu.memory_space<vmem>>, vector<8x128xf32>
    %256 = arith.mulf %252, %255 : vector<8x128xf32>
    %257 = arith.mulf %250, %253 : vector<8x128xf32>
    %258 = arith.addf %256, %257 : vector<8x128xf32>
    %259 = math.tanh %258 : vector<8x128xf32>
    %260 = arith.mulf %254, %259 : vector<8x128xf32>
    %c0_177 = arith.constant 0 : index
    %c0_178 = arith.constant 0 : index
    %261 = vector.load %arg13[%c0_177, %c0_178] : memref<8x128xf32, #tpu.memory_space<vmem>>, vector<8x128xf32>
    tpu.vector_store %arg13[%c0_177, %c0_178], %258 {strides = array<i32>} : memref<8x128xf32, #tpu.memory_space<vmem>>, vector<8x128xf32>,
    %c0_179 = arith.constant 0 : index
    %c0_180 = arith.constant 0 : index
    %262 = vector.load %arg12[%c0_179, %c0_180] : memref<8x128xf32, #tpu.memory_space<vmem>>, vector<8x128xf32>
    tpu.vector_store %arg12[%c0_179, %c0_180], %260 {strides = array<i32>} : memref<8x128xf32, #tpu.memory_space<vmem>>, vector<8x128xf32>,
    %c0_181 = arith.constant 0 : index
    %c0_182 = arith.constant 0 : index
    %263 = vector.load %arg12[%c0_181, %c0_182] : memref<8x128xf32, #tpu.memory_space<vmem>>, vector<8x128xf32>
    %264 = arith.truncf %263 : vector<8x128xf32> to vector<8x128xbf16>
    %c8_183 = arith.constant 8 : index
    %c0_184 = arith.constant 0 : index
    %265 = vector.load %arg11[%c8_183, %c0_184] : memref<64x128xf32, #tpu.memory_space<vmem>>, vector<8x128xf32>
    %cst_185 = arith.constant dense<0.000000e+00> : vector<8x128xf32>
    %266 = tpu.matmul %264, %236, %cst_185 {dimension_numbers = #tpu.dot_dimension_numbers<[1], [0], [0], [1], [0, 0, 1, 1], [], []>} : vector<8x128xbf16>, vector<128x128xbf16>, vector<8x128xf32> -> vector<8x128xf32>
    %267 = arith.addf %265, %266 : vector<8x128xf32>
    %268 = arith.negf %267 : vector<8x128xf32>
    %269 = math.exp %268 : vector<8x128xf32>
    %cst_186 = arith.constant 1.000000e+00 : f32
    %270 = vector.broadcast %cst_186 : f32 to vector<8x128xf32>
    %271 = arith.addf %270, %269 : vector<8x128xf32>
    %272 = arith.divf %270, %271 : vector<8x128xf32>
    %273 = math.tanh %267 : vector<8x128xf32>
    %c96_i32_187 = arith.constant 96 : i32
    %274 = tpu.dynamic_rotate %272 by %c96_i32_187 dim 1 : vector<8x128xf32>, i32 -> vector<8x128xf32>
    %c64_i32_188 = arith.constant 64 : i32
    %275 = tpu.dynamic_rotate %273 by %c64_i32_188 dim 1 : vector<8x128xf32>, i32 -> vector<8x128xf32>
    %c32_i32_189 = arith.constant 32 : i32
    %276 = tpu.dynamic_rotate %272 by %c32_i32_189 dim 1 : vector<8x128xf32>, i32 -> vector<8x128xf32>
    %c0_190 = arith.constant 0 : index
    %c0_191 = arith.constant 0 : index
    %277 = vector.load %arg13[%c0_190, %c0_191] : memref<8x128xf32, #tpu.memory_space<vmem>>, vector<8x128xf32>
    %278 = arith.mulf %274, %277 : vector<8x128xf32>
    %279 = arith.mulf %272, %275 : vector<8x128xf32>
    %280 = arith.addf %278, %279 : vector<8x128xf32>
    %281 = math.tanh %280 : vector<8x128xf32>
    %282 = arith.mulf %276, %281 : vector<8x128xf32>
    %c0_192 = arith.constant 0 : index
    %c0_193 = arith.constant 0 : index
    %283 = vector.load %arg13[%c0_192, %c0_193] : memref<8x128xf32, #tpu.memory_space<vmem>>, vector<8x128xf32>
    tpu.vector_store %arg13[%c0_192, %c0_193], %280 {strides = array<i32>} : memref<8x128xf32, #tpu.memory_space<vmem>>, vector<8x128xf32>,
    %c0_194 = arith.constant 0 : index
    %c0_195 = arith.constant 0 : index
    %284 = vector.load %arg12[%c0_194, %c0_195] : memref<8x128xf32, #tpu.memory_space<vmem>>, vector<8x128xf32>
    tpu.vector_store %arg12[%c0_194, %c0_195], %282 {strides = array<i32>} : memref<8x128xf32, #tpu.memory_space<vmem>>, vector<8x128xf32>,
    %c0_196 = arith.constant 0 : index
    %c0_197 = arith.constant 0 : index
    %285 = vector.load %arg12[%c0_196, %c0_197] : memref<8x128xf32, #tpu.memory_space<vmem>>, vector<8x128xf32>
    %286 = arith.truncf %285 : vector<8x128xf32> to vector<8x128xbf16>
    %c16_198 = arith.constant 16 : index
    %c0_199 = arith.constant 0 : index
    %287 = vector.load %arg11[%c16_198, %c0_199] : memref<64x128xf32, #tpu.memory_space<vmem>>, vector<8x128xf32>
    %cst_200 = arith.constant dense<0.000000e+00> : vector<8x128xf32>
    %288 = tpu.matmul %286, %236, %cst_200 {dimension_numbers = #tpu.dot_dimension_numbers<[1], [0], [0], [1], [0, 0, 1, 1], [], []>} : vector<8x128xbf16>, vector<128x128xbf16>, vector<8x128xf32> -> vector<8x128xf32>
    %289 = arith.addf %287, %288 : vector<8x128xf32>
    %290 = arith.negf %289 : vector<8x128xf32>
    %291 = math.exp %290 : vector<8x128xf32>
    %cst_201 = arith.constant 1.000000e+00 : f32
    %292 = vector.broadcast %cst_201 : f32 to vector<8x128xf32>
    %293 = arith.addf %292, %291 : vector<8x128xf32>
    %294 = arith.divf %292, %293 : vector<8x128xf32>
    %295 = math.tanh %289 : vector<8x128xf32>
    %c96_i32_202 = arith.constant 96 : i32
    %296 = tpu.dynamic_rotate %294 by %c96_i32_202 dim 1 : vector<8x128xf32>, i32 -> vector<8x128xf32>
    %c64_i32_203 = arith.constant 64 : i32
    %297 = tpu.dynamic_rotate %295 by %c64_i32_203 dim 1 : vector<8x128xf32>, i32 -> vector<8x128xf32>
    %c32_i32_204 = arith.constant 32 : i32
    %298 = tpu.dynamic_rotate %294 by %c32_i32_204 dim 1 : vector<8x128xf32>, i32 -> vector<8x128xf32>
    %c0_205 = arith.constant 0 : index
    %c0_206 = arith.constant 0 : index
    %299 = vector.load %arg13[%c0_205, %c0_206] : memref<8x128xf32, #tpu.memory_space<vmem>>, vector<8x128xf32>
    %300 = arith.mulf %296, %299 : vector<8x128xf32>
    %301 = arith.mulf %294, %297 : vector<8x128xf32>
    %302 = arith.addf %300, %301 : vector<8x128xf32>
    %303 = math.tanh %302 : vector<8x128xf32>
    %304 = arith.mulf %298, %303 : vector<8x128xf32>
    %c0_207 = arith.constant 0 : index
    %c0_208 = arith.constant 0 : index
    %305 = vector.load %arg13[%c0_207, %c0_208] : memref<8x128xf32, #tpu.memory_space<vmem>>, vector<8x128xf32>
    tpu.vector_store %arg13[%c0_207, %c0_208], %302 {strides = array<i32>} : memref<8x128xf32, #tpu.memory_space<vmem>>, vector<8x128xf32>,
    %c0_209 = arith.constant 0 : index
    %c0_210 = arith.constant 0 : index
    %306 = vector.load %arg12[%c0_209, %c0_210] : memref<8x128xf32, #tpu.memory_space<vmem>>, vector<8x128xf32>
    tpu.vector_store %arg12[%c0_209, %c0_210], %304 {strides = array<i32>} : memref<8x128xf32, #tpu.memory_space<vmem>>, vector<8x128xf32>,
    %c0_211 = arith.constant 0 : index
    %c0_212 = arith.constant 0 : index
    %307 = vector.load %arg12[%c0_211, %c0_212] : memref<8x128xf32, #tpu.memory_space<vmem>>, vector<8x128xf32>
    %308 = arith.truncf %307 : vector<8x128xf32> to vector<8x128xbf16>
    %c24_213 = arith.constant 24 : index
    %c0_214 = arith.constant 0 : index
    %309 = vector.load %arg11[%c24_213, %c0_214] : memref<64x128xf32, #tpu.memory_space<vmem>>, vector<8x128xf32>
    %cst_215 = arith.constant dense<0.000000e+00> : vector<8x128xf32>
    %310 = tpu.matmul %308, %236, %cst_215 {dimension_numbers = #tpu.dot_dimension_numbers<[1], [0], [0], [1], [0, 0, 1, 1], [], []>} : vector<8x128xbf16>, vector<128x128xbf16>, vector<8x128xf32> -> vector<8x128xf32>
    %311 = arith.addf %309, %310 : vector<8x128xf32>
    %312 = arith.negf %311 : vector<8x128xf32>
    %313 = math.exp %312 : vector<8x128xf32>
    %cst_216 = arith.constant 1.000000e+00 : f32
    %314 = vector.broadcast %cst_216 : f32 to vector<8x128xf32>
    %315 = arith.addf %314, %313 : vector<8x128xf32>
    %316 = arith.divf %314, %315 : vector<8x128xf32>
    %317 = math.tanh %311 : vector<8x128xf32>
    %c96_i32_217 = arith.constant 96 : i32
    %318 = tpu.dynamic_rotate %316 by %c96_i32_217 dim 1 : vector<8x128xf32>, i32 -> vector<8x128xf32>
    %c64_i32_218 = arith.constant 64 : i32
    %319 = tpu.dynamic_rotate %317 by %c64_i32_218 dim 1 : vector<8x128xf32>, i32 -> vector<8x128xf32>
    %c32_i32_219 = arith.constant 32 : i32
    %320 = tpu.dynamic_rotate %316 by %c32_i32_219 dim 1 : vector<8x128xf32>, i32 -> vector<8x128xf32>
    %c0_220 = arith.constant 0 : index
    %c0_221 = arith.constant 0 : index
    %321 = vector.load %arg13[%c0_220, %c0_221] : memref<8x128xf32, #tpu.memory_space<vmem>>, vector<8x128xf32>
    %322 = arith.mulf %318, %321 : vector<8x128xf32>
    %323 = arith.mulf %316, %319 : vector<8x128xf32>
    %324 = arith.addf %322, %323 : vector<8x128xf32>
    %325 = math.tanh %324 : vector<8x128xf32>
    %326 = arith.mulf %320, %325 : vector<8x128xf32>
    %c0_222 = arith.constant 0 : index
    %c0_223 = arith.constant 0 : index
    %327 = vector.load %arg13[%c0_222, %c0_223] : memref<8x128xf32, #tpu.memory_space<vmem>>, vector<8x128xf32>
    tpu.vector_store %arg13[%c0_222, %c0_223], %324 {strides = array<i32>} : memref<8x128xf32, #tpu.memory_space<vmem>>, vector<8x128xf32>,
    %c0_224 = arith.constant 0 : index
    %c0_225 = arith.constant 0 : index
    %328 = vector.load %arg12[%c0_224, %c0_225] : memref<8x128xf32, #tpu.memory_space<vmem>>, vector<8x128xf32>
    tpu.vector_store %arg12[%c0_224, %c0_225], %326 {strides = array<i32>} : memref<8x128xf32, #tpu.memory_space<vmem>>, vector<8x128xf32>,
    %c0_226 = arith.constant 0 : index
    %c0_227 = arith.constant 0 : index
    %329 = vector.load %arg12[%c0_226, %c0_227] : memref<8x128xf32, #tpu.memory_space<vmem>>, vector<8x128xf32>
    %330 = arith.truncf %329 : vector<8x128xf32> to vector<8x128xbf16>
    %c32_228 = arith.constant 32 : index
    %c0_229 = arith.constant 0 : index
    %331 = vector.load %arg11[%c32_228, %c0_229] : memref<64x128xf32, #tpu.memory_space<vmem>>, vector<8x128xf32>
    %cst_230 = arith.constant dense<0.000000e+00> : vector<8x128xf32>
    %332 = tpu.matmul %330, %236, %cst_230 {dimension_numbers = #tpu.dot_dimension_numbers<[1], [0], [0], [1], [0, 0, 1, 1], [], []>} : vector<8x128xbf16>, vector<128x128xbf16>, vector<8x128xf32> -> vector<8x128xf32>
    %333 = arith.addf %331, %332 : vector<8x128xf32>
    %334 = arith.negf %333 : vector<8x128xf32>
    %335 = math.exp %334 : vector<8x128xf32>
    %cst_231 = arith.constant 1.000000e+00 : f32
    %336 = vector.broadcast %cst_231 : f32 to vector<8x128xf32>
    %337 = arith.addf %336, %335 : vector<8x128xf32>
    %338 = arith.divf %336, %337 : vector<8x128xf32>
    %339 = math.tanh %333 : vector<8x128xf32>
    %c96_i32_232 = arith.constant 96 : i32
    %340 = tpu.dynamic_rotate %338 by %c96_i32_232 dim 1 : vector<8x128xf32>, i32 -> vector<8x128xf32>
    %c64_i32_233 = arith.constant 64 : i32
    %341 = tpu.dynamic_rotate %339 by %c64_i32_233 dim 1 : vector<8x128xf32>, i32 -> vector<8x128xf32>
    %c32_i32_234 = arith.constant 32 : i32
    %342 = tpu.dynamic_rotate %338 by %c32_i32_234 dim 1 : vector<8x128xf32>, i32 -> vector<8x128xf32>
    %c0_235 = arith.constant 0 : index
    %c0_236 = arith.constant 0 : index
    %343 = vector.load %arg13[%c0_235, %c0_236] : memref<8x128xf32, #tpu.memory_space<vmem>>, vector<8x128xf32>
    %344 = arith.mulf %340, %343 : vector<8x128xf32>
    %345 = arith.mulf %338, %341 : vector<8x128xf32>
    %346 = arith.addf %344, %345 : vector<8x128xf32>
    %347 = math.tanh %346 : vector<8x128xf32>
    %348 = arith.mulf %342, %347 : vector<8x128xf32>
    %c0_237 = arith.constant 0 : index
    %c0_238 = arith.constant 0 : index
    %349 = vector.load %arg13[%c0_237, %c0_238] : memref<8x128xf32, #tpu.memory_space<vmem>>, vector<8x128xf32>
    tpu.vector_store %arg13[%c0_237, %c0_238], %346 {strides = array<i32>} : memref<8x128xf32, #tpu.memory_space<vmem>>, vector<8x128xf32>,
    %c0_239 = arith.constant 0 : index
    %c0_240 = arith.constant 0 : index
    %350 = vector.load %arg12[%c0_239, %c0_240] : memref<8x128xf32, #tpu.memory_space<vmem>>, vector<8x128xf32>
    tpu.vector_store %arg12[%c0_239, %c0_240], %348 {strides = array<i32>} : memref<8x128xf32, #tpu.memory_space<vmem>>, vector<8x128xf32>,
    %c0_241 = arith.constant 0 : index
    %c0_242 = arith.constant 0 : index
    %351 = vector.load %arg12[%c0_241, %c0_242] : memref<8x128xf32, #tpu.memory_space<vmem>>, vector<8x128xf32>
    %352 = arith.truncf %351 : vector<8x128xf32> to vector<8x128xbf16>
    %c40_243 = arith.constant 40 : index
    %c0_244 = arith.constant 0 : index
    %353 = vector.load %arg11[%c40_243, %c0_244] : memref<64x128xf32, #tpu.memory_space<vmem>>, vector<8x128xf32>
    %cst_245 = arith.constant dense<0.000000e+00> : vector<8x128xf32>
    %354 = tpu.matmul %352, %236, %cst_245 {dimension_numbers = #tpu.dot_dimension_numbers<[1], [0], [0], [1], [0, 0, 1, 1], [], []>} : vector<8x128xbf16>, vector<128x128xbf16>, vector<8x128xf32> -> vector<8x128xf32>
    %355 = arith.addf %353, %354 : vector<8x128xf32>
    %356 = arith.negf %355 : vector<8x128xf32>
    %357 = math.exp %356 : vector<8x128xf32>
    %cst_246 = arith.constant 1.000000e+00 : f32
    %358 = vector.broadcast %cst_246 : f32 to vector<8x128xf32>
    %359 = arith.addf %358, %357 : vector<8x128xf32>
    %360 = arith.divf %358, %359 : vector<8x128xf32>
    %361 = math.tanh %355 : vector<8x128xf32>
    %c96_i32_247 = arith.constant 96 : i32
    %362 = tpu.dynamic_rotate %360 by %c96_i32_247 dim 1 : vector<8x128xf32>, i32 -> vector<8x128xf32>
    %c64_i32_248 = arith.constant 64 : i32
    %363 = tpu.dynamic_rotate %361 by %c64_i32_248 dim 1 : vector<8x128xf32>, i32 -> vector<8x128xf32>
    %c32_i32_249 = arith.constant 32 : i32
    %364 = tpu.dynamic_rotate %360 by %c32_i32_249 dim 1 : vector<8x128xf32>, i32 -> vector<8x128xf32>
    %c0_250 = arith.constant 0 : index
    %c0_251 = arith.constant 0 : index
    %365 = vector.load %arg13[%c0_250, %c0_251] : memref<8x128xf32, #tpu.memory_space<vmem>>, vector<8x128xf32>
    %366 = arith.mulf %362, %365 : vector<8x128xf32>
    %367 = arith.mulf %360, %363 : vector<8x128xf32>
    %368 = arith.addf %366, %367 : vector<8x128xf32>
    %369 = math.tanh %368 : vector<8x128xf32>
    %370 = arith.mulf %364, %369 : vector<8x128xf32>
    %c0_252 = arith.constant 0 : index
    %c0_253 = arith.constant 0 : index
    %371 = vector.load %arg13[%c0_252, %c0_253] : memref<8x128xf32, #tpu.memory_space<vmem>>, vector<8x128xf32>
    tpu.vector_store %arg13[%c0_252, %c0_253], %368 {strides = array<i32>} : memref<8x128xf32, #tpu.memory_space<vmem>>, vector<8x128xf32>,
    %c0_254 = arith.constant 0 : index
    %c0_255 = arith.constant 0 : index
    %372 = vector.load %arg12[%c0_254, %c0_255] : memref<8x128xf32, #tpu.memory_space<vmem>>, vector<8x128xf32>
    tpu.vector_store %arg12[%c0_254, %c0_255], %370 {strides = array<i32>} : memref<8x128xf32, #tpu.memory_space<vmem>>, vector<8x128xf32>,
    %c0_256 = arith.constant 0 : index
    %c0_257 = arith.constant 0 : index
    %373 = vector.load %arg12[%c0_256, %c0_257] : memref<8x128xf32, #tpu.memory_space<vmem>>, vector<8x128xf32>
    %374 = arith.truncf %373 : vector<8x128xf32> to vector<8x128xbf16>
    %c48_258 = arith.constant 48 : index
    %c0_259 = arith.constant 0 : index
    %375 = vector.load %arg11[%c48_258, %c0_259] : memref<64x128xf32, #tpu.memory_space<vmem>>, vector<8x128xf32>
    %cst_260 = arith.constant dense<0.000000e+00> : vector<8x128xf32>
    %376 = tpu.matmul %374, %236, %cst_260 {dimension_numbers = #tpu.dot_dimension_numbers<[1], [0], [0], [1], [0, 0, 1, 1], [], []>} : vector<8x128xbf16>, vector<128x128xbf16>, vector<8x128xf32> -> vector<8x128xf32>
    %377 = arith.addf %375, %376 : vector<8x128xf32>
    %378 = arith.negf %377 : vector<8x128xf32>
    %379 = math.exp %378 : vector<8x128xf32>
    %cst_261 = arith.constant 1.000000e+00 : f32
    %380 = vector.broadcast %cst_261 : f32 to vector<8x128xf32>
    %381 = arith.addf %380, %379 : vector<8x128xf32>
    %382 = arith.divf %380, %381 : vector<8x128xf32>
    %383 = math.tanh %377 : vector<8x128xf32>
    %c96_i32_262 = arith.constant 96 : i32
    %384 = tpu.dynamic_rotate %382 by %c96_i32_262 dim 1 : vector<8x128xf32>, i32 -> vector<8x128xf32>
    %c64_i32_263 = arith.constant 64 : i32
    %385 = tpu.dynamic_rotate %383 by %c64_i32_263 dim 1 : vector<8x128xf32>, i32 -> vector<8x128xf32>
    %c32_i32_264 = arith.constant 32 : i32
    %386 = tpu.dynamic_rotate %382 by %c32_i32_264 dim 1 : vector<8x128xf32>, i32 -> vector<8x128xf32>
    %c0_265 = arith.constant 0 : index
    %c0_266 = arith.constant 0 : index
    %387 = vector.load %arg13[%c0_265, %c0_266] : memref<8x128xf32, #tpu.memory_space<vmem>>, vector<8x128xf32>
    %388 = arith.mulf %384, %387 : vector<8x128xf32>
    %389 = arith.mulf %382, %385 : vector<8x128xf32>
    %390 = arith.addf %388, %389 : vector<8x128xf32>
    %391 = math.tanh %390 : vector<8x128xf32>
    %392 = arith.mulf %386, %391 : vector<8x128xf32>
    %c0_267 = arith.constant 0 : index
    %c0_268 = arith.constant 0 : index
    %393 = vector.load %arg13[%c0_267, %c0_268] : memref<8x128xf32, #tpu.memory_space<vmem>>, vector<8x128xf32>
    tpu.vector_store %arg13[%c0_267, %c0_268], %390 {strides = array<i32>} : memref<8x128xf32, #tpu.memory_space<vmem>>, vector<8x128xf32>,
    %c0_269 = arith.constant 0 : index
    %c0_270 = arith.constant 0 : index
    %394 = vector.load %arg12[%c0_269, %c0_270] : memref<8x128xf32, #tpu.memory_space<vmem>>, vector<8x128xf32>
    tpu.vector_store %arg12[%c0_269, %c0_270], %392 {strides = array<i32>} : memref<8x128xf32, #tpu.memory_space<vmem>>, vector<8x128xf32>,
    %c0_271 = arith.constant 0 : index
    %c0_272 = arith.constant 0 : index
    %395 = vector.load %arg12[%c0_271, %c0_272] : memref<8x128xf32, #tpu.memory_space<vmem>>, vector<8x128xf32>
    %396 = arith.truncf %395 : vector<8x128xf32> to vector<8x128xbf16>
    %c56_273 = arith.constant 56 : index
    %c0_274 = arith.constant 0 : index
    %397 = vector.load %arg11[%c56_273, %c0_274] : memref<64x128xf32, #tpu.memory_space<vmem>>, vector<8x128xf32>
    %cst_275 = arith.constant dense<0.000000e+00> : vector<8x128xf32>
    %398 = tpu.matmul %396, %236, %cst_275 {dimension_numbers = #tpu.dot_dimension_numbers<[1], [0], [0], [1], [0, 0, 1, 1], [], []>} : vector<8x128xbf16>, vector<128x128xbf16>, vector<8x128xf32> -> vector<8x128xf32>
    %399 = arith.addf %397, %398 : vector<8x128xf32>
    %400 = arith.negf %399 : vector<8x128xf32>
    %401 = math.exp %400 : vector<8x128xf32>
    %cst_276 = arith.constant 1.000000e+00 : f32
    %402 = vector.broadcast %cst_276 : f32 to vector<8x128xf32>
    %403 = arith.addf %402, %401 : vector<8x128xf32>
    %404 = arith.divf %402, %403 : vector<8x128xf32>
    %405 = math.tanh %399 : vector<8x128xf32>
    %c96_i32_277 = arith.constant 96 : i32
    %406 = tpu.dynamic_rotate %404 by %c96_i32_277 dim 1 : vector<8x128xf32>, i32 -> vector<8x128xf32>
    %c64_i32_278 = arith.constant 64 : i32
    %407 = tpu.dynamic_rotate %405 by %c64_i32_278 dim 1 : vector<8x128xf32>, i32 -> vector<8x128xf32>
    %c32_i32_279 = arith.constant 32 : i32
    %408 = tpu.dynamic_rotate %404 by %c32_i32_279 dim 1 : vector<8x128xf32>, i32 -> vector<8x128xf32>
    %c0_280 = arith.constant 0 : index
    %c0_281 = arith.constant 0 : index
    %409 = vector.load %arg13[%c0_280, %c0_281] : memref<8x128xf32, #tpu.memory_space<vmem>>, vector<8x128xf32>
    %410 = arith.mulf %406, %409 : vector<8x128xf32>
    %411 = arith.mulf %404, %407 : vector<8x128xf32>
    %412 = arith.addf %410, %411 : vector<8x128xf32>
    %413 = math.tanh %412 : vector<8x128xf32>
    %414 = arith.mulf %408, %413 : vector<8x128xf32>
    %c0_282 = arith.constant 0 : index
    %c0_283 = arith.constant 0 : index
    %415 = vector.load %arg13[%c0_282, %c0_283] : memref<8x128xf32, #tpu.memory_space<vmem>>, vector<8x128xf32>
    tpu.vector_store %arg13[%c0_282, %c0_283], %412 {strides = array<i32>} : memref<8x128xf32, #tpu.memory_space<vmem>>, vector<8x128xf32>,
    %c0_284 = arith.constant 0 : index
    %c0_285 = arith.constant 0 : index
    %416 = vector.load %arg12[%c0_284, %c0_285] : memref<8x128xf32, #tpu.memory_space<vmem>>, vector<8x128xf32>
    tpu.vector_store %arg12[%c0_284, %c0_285], %414 {strides = array<i32>} : memref<8x128xf32, #tpu.memory_space<vmem>>, vector<8x128xf32>,
    %c0_286 = arith.constant 0 : index
    %c0_287 = arith.constant 0 : index
    %417 = vector.load %arg12[%c0_286, %c0_287] : memref<8x128xf32, #tpu.memory_space<vmem>>, vector<8x128xf32>
    %418 = arith.truncf %417 : vector<8x128xf32> to vector<8x128xbf16>
    %c0_288 = arith.constant 0 : index
    %c0_289 = arith.constant 0 : index
    %419 = vector.load %arg5[%c0_288, %c0_289] : memref<128x128xbf16, #tpu.memory_space<vmem>>, vector<128x128xbf16>
    %cst_290 = arith.constant dense<0.000000e+00> : vector<8x128xf32>
    %420 = tpu.matmul %418, %419, %cst_290 {dimension_numbers = #tpu.dot_dimension_numbers<[1], [0], [0], [1], [0, 0, 1, 1], [], []>} : vector<8x128xbf16>, vector<128x128xbf16>, vector<8x128xf32> -> vector<8x128xf32>
    %c0_291 = arith.constant 0 : index
    %c0_292 = arith.constant 0 : index
    %421 = vector.load %arg6[%c0_291, %c0_292] : memref<1x128xf32, #tpu.memory_space<vmem>>, vector<1x128xf32>
    %422 = vector.broadcast %421 : vector<1x128xf32> to vector<8x128xf32>
    %423 = arith.addf %420, %422 : vector<8x128xf32>
    %424 = arith.truncf %423 : vector<8x128xf32> to vector<8x128xbf16>
    %c0_293 = arith.constant 0 : index
    %c0_294 = arith.constant 0 : index
    %425 = vector.load %arg7[%c0_293, %c0_294] : memref<128x128xbf16, #tpu.memory_space<vmem>>, vector<128x128xbf16>
    %cst_295 = arith.constant dense<0.000000e+00> : vector<8x128xf32>
    %426 = tpu.matmul %424, %425, %cst_295 {dimension_numbers = #tpu.dot_dimension_numbers<[1], [0], [0], [1], [0, 0, 1, 1], [], []>} : vector<8x128xbf16>, vector<128x128xbf16>, vector<8x128xf32> -> vector<8x128xf32>
    %c0_296 = arith.constant 0 : index
    %c0_297 = arith.constant 0 : index
    %427 = vector.load %arg8[%c0_296, %c0_297] : memref<1x128xf32, #tpu.memory_space<vmem>>, vector<1x128xf32>
    %428 = vector.broadcast %427 : vector<1x128xf32> to vector<8x128xf32>
    %429 = arith.addf %426, %428 : vector<8x128xf32>
    %430 = arith.negf %429 : vector<8x128xf32>
    %431 = math.exp %430 : vector<8x128xf32>
    %cst_298 = arith.constant 1.000000e+00 : f32
    %432 = vector.broadcast %cst_298 : f32 to vector<8x128xf32>
    %433 = arith.addf %432, %431 : vector<8x128xf32>
    %434 = arith.divf %432, %433 : vector<8x128xf32>
    %c0_299 = arith.constant 0 : index
    %c0_300 = arith.constant 0 : index
    %435 = vector.load %arg9[%c0_299, %c0_300] : memref<8x128xf32, #tpu.memory_space<vmem>>, vector<8x128xf32>
    tpu.vector_store %arg9[%c0_299, %c0_300], %434 {strides = array<i32>} : memref<8x128xf32, #tpu.memory_space<vmem>>, vector<8x128xf32>,
    return
  }
  func.func @transform_0(%arg0: i32) -> (i32, i32) {
    %c0_i32 = arith.constant 0 : i32
    %c0_i32_0 = arith.constant 0 : i32
    return %arg0, %c0_i32 : i32, i32
  }
  func.func @transform_1(%arg0: i32) -> (i32, i32, i32) {
    %c0_i32 = arith.constant 0 : i32
    %c0_i32_0 = arith.constant 0 : i32
    %c0_i32_1 = arith.constant 0 : i32
    %c0_i32_2 = arith.constant 0 : i32
    return %c0_i32, %c0_i32_0, %c0_i32_1 : i32, i32, i32
  }
  func.func @transform_2(%arg0: i32) -> (i32, i32, i32) {
    %c0_i32 = arith.constant 0 : i32
    %c0_i32_0 = arith.constant 0 : i32
    %c0_i32_1 = arith.constant 0 : i32
    %c0_i32_2 = arith.constant 0 : i32
    return %c0_i32, %c0_i32_0, %c0_i32_1 : i32, i32, i32
  }
  func.func @transform_3(%arg0: i32) -> (i32, i32, i32) {
    %c0_i32 = arith.constant 0 : i32
    %c0_i32_0 = arith.constant 0 : i32
    %c0_i32_1 = arith.constant 0 : i32
    %c0_i32_2 = arith.constant 0 : i32
    return %c0_i32, %c0_i32_0, %c0_i32_1 : i32, i32, i32
  }
  func.func @transform_4(%arg0: i32) -> (i32, i32) {
    %c0_i32 = arith.constant 0 : i32
    %c0_i32_0 = arith.constant 0 : i32
    %c0_i32_1 = arith.constant 0 : i32
    return %c0_i32, %c0_i32_0 : i32, i32
  }
  func.func @transform_5(%arg0: i32) -> (i32, i32) {
    %c0_i32 = arith.constant 0 : i32
    %c0_i32_0 = arith.constant 0 : i32
    %c0_i32_1 = arith.constant 0 : i32
    return %c0_i32, %c0_i32_0 : i32, i32
  }
  func.func @transform_6(%arg0: i32) -> (i32, i32) {
    %c0_i32 = arith.constant 0 : i32
    %c0_i32_0 = arith.constant 0 : i32
    %c0_i32_1 = arith.constant 0 : i32
    return %c0_i32, %c0_i32_0 : i32, i32
  }
  func.func @transform_7(%arg0: i32) -> (i32, i32) {
    %c0_i32 = arith.constant 0 : i32
    %c0_i32_0 = arith.constant 0 : i32
    %c0_i32_1 = arith.constant 0 : i32
    return %c0_i32, %c0_i32_0 : i32, i32
  }
  func.func @transform_8(%arg0: i32) -> (i32, i32) {
    %c0_i32 = arith.constant 0 : i32
    %c0_i32_0 = arith.constant 0 : i32
    return %arg0, %c0_i32 : i32, i32
  }
}

</mosaic_0001>

<llo_original>
// kernel: tpu_custom_call.1
$region0: #{tpu_custom_call.1}
  #allocation0 [shape = 'u32[]', space=smem, size = 0x4, offset = 0x4, fixed_abs, tag = 'smem constant byte address 0x4 - core index']
  #allocation1 [shape = 'u32[72,128]{1,0:T(1,128)}', space=vmem, size = 0x9000, scoped, tag = 'internal scratch']
  #allocation2 [shape = 'f32[64,128]{1,0:T(8,128)}', space=vmem, size = 0x8000, scoped, tag = 'scratch operand']
  #allocation3 [shape = 'f32[64,128]{1,0:T(8,128)}', space=vmem, size = 0x8000, scoped, tag = 'scratch operand']
  #allocation4 [shape = 'f32[8,128]{1,0:T(8,128)}', space=vmem, size = 0x1000, scoped, tag = 'scratch operand']
  #allocation5 [shape = 'f32[8,128]{1,0:T(8,128)}', space=vmem, size = 0x1000, scoped, tag = 'scratch operand']
  %s0 = inlined_call_operand.hbm [shape: bf16[64,128], index: 0, kind: input, shape index: {}]
  %s1 = inlined_call_operand.hbm [shape: bf16[2,128,128], index: 1, kind: input, shape index: {}]
  %s2 = inlined_call_operand.hbm [shape: bf16[2,128,128], index: 2, kind: input, shape index: {}]
  %s3 = inlined_call_operand.vmem [shape: f32[2,1,128], index: 3, kind: input, shape index: {}]
  %s4 = inlined_call_operand.hbm [shape: bf16[128,128], index: 4, kind: input, shape index: {}]
  %s5 = inlined_call_operand.vmem [shape: f32[1,128], index: 5, kind: input, shape index: {}]
  %s6 = inlined_call_operand.hbm [shape: bf16[128,128], index: 6, kind: input, shape index: {}]
  %s7 = inlined_call_operand.vmem [shape: f32[1,128], index: 7, kind: input, shape index: {}]
  %s8 = inlined_call_operand.hbm [shape: f32[8,128], index: 8, kind: output, shape index: {}]
  %s9 = sld [smem:[#allocation0]]
  $region62: #{tpu_custom_call.1} parent=0
    _
  %s11 = ssub.s32 1, %s9
  %s12 = scalar_select 0, %s11, %s9
  $region1: #{tpu_custom_call.1} parent=0
    #allocation6 [shape = 'u8[16384]{0}', space=vmem, size = 0x4000, scoped, tag = 'input window, operand 0, single buffered']
    #allocation7 [shape = 's32[1]{0}', space=sflag, size = 0x4, scoped, tag = 'scoped memory for tpu_custom_call.1']
    #allocation8 [shape = 's32[1]{0}', space=sflag, size = 0x4, scoped, tag = 'scoped memory for tpu_custom_call.1']
    #allocation9 [shape = 'u8[65536]{0}', space=vmem, size = 0x10000, scoped, tag = 'input window, operand 1, single buffered']
    #allocation10 [shape = 's32[1]{0}', space=sflag, size = 0x4, scoped, tag = 'scoped memory for tpu_custom_call.1']
    #allocation11 [shape = 'u8[65536]{0}', space=vmem, size = 0x10000, scoped, tag = 'input window, operand 2, single buffered']
    #allocation12 [shape = 'u8[32768]{0}', space=vmem, size = 0x8000, scoped, tag = 'input window, operand 4, single buffered']
    #allocation13 [shape = 's32[1]{0}', space=sflag, size = 0x4, scoped, tag = 'scoped memory for tpu_custom_call.1']
    #allocation14 [shape = 'u8[32768]{0}', space=vmem, size = 0x8000, scoped, tag = 'input window, operand 6, single buffered']
    #allocation15 [shape = 'u8[4096]{0}', space=vmem, size = 0x1000, scoped, tag = 'output window, operand 0, single buffered']
    %13 = vsyncpa [#allocation7], 0
    %14 = vsyncpa [#allocation10], 0
    %15 = vsyncpa [#allocation13], 0
    %16 = vsyncpa [#allocation8], 0
    // Predicated region
    $region2: #{tpu_custom_call.1} parent=1 // pred_check
      _
    $region3: #{tpu_custom_call.1} parent=1 // pred_check_branch
      %18 = sbr.rel (0) target = $region5
    $region4: #{tpu_custom_call.1} parent=1 // pred_region
      %20 = vsyncadd [#allocation7], 0
      %s21 = sshll.u32 %s0, 4
      %s22 = int_to_ptr.hbm [resolvable:$true] %s21
      %s23 = sshll.u32 [#allocation6], 4
      %s24 = int_to_ptr.vmem [resolvable:$true] %s23
      %29 = dma.hbm_to_vmem [thread:$0]  %s22, 512, %s24, [#allocation7], 64, 64, 4
    $region5: #{tpu_custom_call.1} parent=1 // pred_fallthru
      _
    // Predicated region
    $region6: #{tpu_custom_call.1} parent=1 // pred_check
      _
    $region7: #{tpu_custom_call.1} parent=1 // pred_check_branch
      %31 = sbr.rel (0) target = $region9
    $region8: #{tpu_custom_call.1} parent=1 // pred_region
      %33 = vsyncadd [#allocation10], 0
      %s34 = sshll.u32 %s1, 4
      %s35 = int_to_ptr.hbm [resolvable:$true] %s34
      %s36 = sshll.u32 [#allocation9], 4
      %s37 = int_to_ptr.vmem [resolvable:$true] %s36
      %42 = dma.hbm_to_vmem [thread:$0]  %s35, 2048, %s37, [#allocation10], 64, 64, 4
    $region9: #{tpu_custom_call.1} parent=1 // pred_fallthru
      _
    // Predicated region
    $region10: #{tpu_custom_call.1} parent=1 // pred_check
      _
    $region11: #{tpu_custom_call.1} parent=1 // pred_check_branch
      %44 = sbr.rel (0) target = $region13
    $region12: #{tpu_custom_call.1} parent=1 // pred_region
      %46 = vsyncadd [#allocation10], 0
      %s47 = sshll.u32 %s2, 4
      %s48 = int_to_ptr.hbm [resolvable:$true] %s47
      %s49 = sshll.u32 [#allocation11], 4
      %s50 = int_to_ptr.vmem [resolvable:$true] %s49
      %55 = dma.hbm_to_vmem [thread:$0]  %s48, 2048, %s50, [#allocation10], 64, 64, 4
    $region13: #{tpu_custom_call.1} parent=1 // pred_fallthru
      _
    // Predicated region
    $region14: #{tpu_custom_call.1} parent=1 // pred_check
      _
    $region15: #{tpu_custom_call.1} parent=1 // pred_check_branch
      %57 = sbr.rel (0) target = $region17
    $region16: #{tpu_custom_call.1} parent=1 // pred_region
      _
    $region17: #{tpu_custom_call.1} parent=1 // pred_fallthru
      _
    // Predicated region
    $region18: #{tpu_custom_call.1} parent=1 // pred_check
      _
    $region19: #{tpu_custom_call.1} parent=1 // pred_check_branch
      %59 = sbr.rel (0) target = $region21
    $region20: #{tpu_custom_call.1} parent=1 // pred_region
      %61 = vsyncadd [#allocation13], 0
      %s62 = sshll.u32 %s4, 4
      %s63 = int_to_ptr.hbm [resolvable:$true] %s62
      %s64 = sshll.u32 [#allocation12], 4
      %s65 = int_to_ptr.vmem [resolvable:$true] %s64
      %70 = dma.hbm_to_vmem [thread:$0]  %s63, 1024, %s65, [#allocation13], 64, 64, 4
    $region21: #{tpu_custom_call.1} parent=1 // pred_fallthru
      _
    // Predicated region
    $region22: #{tpu_custom_call.1} parent=1 // pred_check
      _
    $region23: #{tpu_custom_call.1} parent=1 // pred_check_branch
      %72 = sbr.rel (0) target = $region25
    $region24: #{tpu_custom_call.1} parent=1 // pred_region
      _
    $region25: #{tpu_custom_call.1} parent=1 // pred_fallthru
      _
    // Predicated region
    $region26: #{tpu_custom_call.1} parent=1 // pred_check
      _
    $region27: #{tpu_custom_call.1} parent=1 // pred_check_branch
      %74 = sbr.rel (0) target = $region29
    $region28: #{tpu_custom_call.1} parent=1 // pred_region
      %76 = vsyncadd [#allocation13], 0
      %s77 = sshll.u32 %s6, 4
      %s78 = int_to_ptr.hbm [resolvable:$true] %s77
      %s79 = sshll.u32 [#allocation14], 4
      %s80 = int_to_ptr.vmem [resolvable:$true] %s79
      %85 = dma.hbm_to_vmem [thread:$0]  %s78, 1024, %s80, [#allocation13], 64, 64, 4
    $region29: #{tpu_custom_call.1} parent=1 // pred_fallthru
      _
    // Predicated region
    $region30: #{tpu_custom_call.1} parent=1 // pred_check
      _
    $region31: #{tpu_custom_call.1} parent=1 // pred_check_branch
      %87 = sbr.rel (0) target = $region33
    $region32: #{tpu_custom_call.1} parent=1 // pred_region
      _
    $region33: #{tpu_custom_call.1} parent=1 // pred_fallthru
      _
    // Predicated region
    $region34: #{tpu_custom_call.1} parent=1 // pred_check
      _
    $region35: #{tpu_custom_call.1} parent=1 // pred_check_branch
      %89 = sbr.rel (0) target = $region37
    $region36: #{tpu_custom_call.1} parent=1 // pred_region
      %91 = dma.done [#allocation7], 512
    $region37: #{tpu_custom_call.1} parent=1 // pred_fallthru
      _
    // Predicated region
    $region38: #{tpu_custom_call.1} parent=1 // pred_check
      _
    $region39: #{tpu_custom_call.1} parent=1 // pred_check_branch
      %93 = sbr.rel (0) target = $region41
    $region40: #{tpu_custom_call.1} parent=1 // pred_region
      %95 = dma.done [#allocation10], 2048
    $region41: #{tpu_custom_call.1} parent=1 // pred_fallthru
      _
    // Predicated region
    $region42: #{tpu_custom_call.1} parent=1 // pred_check
      _
    $region43: #{tpu_custom_call.1} parent=1 // pred_check_branch
      %97 = sbr.rel (0) target = $region45
    $region44: #{tpu_custom_call.1} parent=1 // pred_region
      %99 = dma.done [#allocation10], 2048
    $region45: #{tpu_custom_call.1} parent=1 // pred_fallthru
      _
    // Predicated region
    $region46: #{tpu_custom_call.1} parent=1 // pred_check
      _
    $region47: #{tpu_custom_call.1} parent=1 // pred_check_branch
      %101 = sbr.rel (0) target = $region49
    $region48: #{tpu_custom_call.1} parent=1 // pred_region
      %103 = dma.done [#allocation13], 1024
    $region49: #{tpu_custom_call.1} parent=1 // pred_fallthru
      _
    // Predicated region
    $region50: #{tpu_custom_call.1} parent=1 // pred_check
      _
    $region51: #{tpu_custom_call.1} parent=1 // pred_check_branch
      %105 = sbr.rel (0) target = $region53
    $region52: #{tpu_custom_call.1} parent=1 // pred_region
      %107 = dma.done [#allocation13], 1024
    $region53: #{tpu_custom_call.1} parent=1 // pred_fallthru
      _
    %v108 = vld [vmem:[#allocation6] sm:$0xf]
    %v109 = vld [vmem:[#allocation6 + $0x4] sm:$0xf]
    %v110 = vld [vmem:[#allocation6 + $0x8] sm:$0xf]
    %v111 = vld [vmem:[#allocation6 + $0xc] sm:$0xf]
    %v112 = vld [vmem:[#allocation6 + $0x10] sm:$0xf]
    %v113 = vld [vmem:[#allocation6 + $0x14] sm:$0xf]
    %v114 = vld [vmem:[#allocation6 + $0x18] sm:$0xf]
    %v115 = vld [vmem:[#allocation6 + $0x1c] sm:$0xf]
    %v116 = vld [vmem:[#allocation9] sm:$0xf]
    %v117 = vld [vmem:[#allocation9 + $0x4] sm:$0xf]
    %v118 = vld [vmem:[#allocation9 + $0x8] sm:$0xf]
    %v119 = vld [vmem:[#allocation9 + $0xc] sm:$0xf]
    %v120 = vld [vmem:[#allocation9 + $0x10] sm:$0xf]
    %v121 = vld [vmem:[#allocation9 + $0x14] sm:$0xf]
    %v122 = vld [vmem:[#allocation9 + $0x18] sm:$0xf]
    %v123 = vld [vmem:[#allocation9 + $0x1c] sm:$0xf]
    %v124 = vld [vmem:[#allocation9 + $0x20] sm:$0xf]
    %v125 = vld [vmem:[#allocation9 + $0x24] sm:$0xf]
    %v126 = vld [vmem:[#allocation9 + $0x28] sm:$0xf]
    %v127 = vld [vmem:[#allocation9 + $0x2c] sm:$0xf]
    %v128 = vld [vmem:[#allocation9 + $0x30] sm:$0xf]
    %v129 = vld [vmem:[#allocation9 + $0x34] sm:$0xf]
    %v130 = vld [vmem:[#allocation9 + $0x38] sm:$0xf]
    %v131 = vld [vmem:[#allocation9 + $0x3c] sm:$0xf]
    %v132 = vld [vmem:[%s3] sm:$0x1]
    %v134 = vperm.slane %v132, 0
    %v144 = vunpack.c.l.b16 %v108
    %v145 = vunpack.c.l.b16 %v109
    %v146 = vunpack.c.l.b16 %v110
    %v147 = vunpack.c.l.b16 %v111
    %v148 = vunpack.c.l.b16 %v112
    %v149 = vunpack.c.l.b16 %v113
    %v150 = vunpack.c.l.b16 %v114
    %v151 = vunpack.c.l.b16 %v115
    %v152 = vpack.c.b16 %v145, %v144
    %v153 = vpack.c.b16 %v147, %v146
    %v154 = vpack.c.b16 %v149, %v148
    %v155 = vpack.c.b16 %v151, %v150
    %v176 = vunpack.c.l.b16 %v116
    %v177 = vunpack.c.l.b16 %v117
    %v178 = vunpack.c.l.b16 %v118
    %v179 = vunpack.c.l.b16 %v119
    %v180 = vunpack.c.l.b16 %v120
    %v181 = vunpack.c.l.b16 %v121
    %v182 = vunpack.c.l.b16 %v122
    %v183 = vunpack.c.l.b16 %v123
    %v184 = vunpack.c.l.b16 %v124
    %v185 = vunpack.c.l.b16 %v125
    %v186 = vunpack.c.l.b16 %v126
    %v187 = vunpack.c.l.b16 %v127
    %v188 = vunpack.c.l.b16 %v128
    %v189 = vunpack.c.l.b16 %v129
    %v190 = vunpack.c.l.b16 %v130
    %v191 = vunpack.c.l.b16 %v131
    %v192 = vpack.c.b16 %v177, %v176
    %v193 = vpack.c.b16 %v179, %v178
    %v194 = vpack.c.b16 %v181, %v180
    %v195 = vpack.c.b16 %v183, %v182
    %v196 = vpack.c.b16 %v185, %v184
    %v197 = vpack.c.b16 %v187, %v186
    %v198 = vpack.c.b16 %v189, %v188
    %v199 = vpack.c.b16 %v191, %v190
    %208 = vmatpush.bf16.msra.mxu0 %v199
    %209 = vmatpush.bf16.msra.mxu0 %v198
    %210 = vmatpush.bf16.msra.mxu0 %v197
    %211 = vmatpush.bf16.msra.mxu0 %v196
    %212 = vmatpush.bf16.msra.mxu0 %v195
    %213 = vmatpush.bf16.msra.mxu0 %v194
    %214 = vmatpush.bf16.msra.mxu0 %v193
    %215 = vmatpush.bf16.msra.mxu0 %v192
    %216 = vmatmul.bf16.gmra.mxu0 %v152
    %v217 = vpop.f32.mrf.mxu0
    %v218 = vadd.f32 %v134, %v217
    %v219 = vpop.f32.mrf.mxu0
    %v220 = vadd.f32 %v134, %v219
    %221 = vmatmul.bf16.gmra.mxu0 %v153
    %v222 = vpop.f32.mrf.mxu0
    %v223 = vadd.f32 %v134, %v222
    %v224 = vpop.f32.mrf.mxu0
    %v225 = vadd.f32 %v134, %v224
    %226 = vmatmul.bf16.gmra.mxu0 %v154
    %v227 = vpop.f32.mrf.mxu0
    %v228 = vadd.f32 %v134, %v227
    %v229 = vpop.f32.mrf.mxu0
    %v230 = vadd.f32 %v134, %v229
    %231 = vmatmul.bf16.gmra.mxu0 %v155
    %v232 = vpop.f32.mrf.mxu0
    %v233 = vadd.f32 %v134, %v232
    %v234 = vpop.f32.mrf.mxu0
    %v235 = vadd.f32 %v134, %v234
    %236 = vdwg.mxu0
    %237 = vst [vmem:[#allocation2] sm:$0xff] %v218
    %238 = vst [vmem:[#allocation2 + $0x8] sm:$0xff] %v220
    %239 = vst [vmem:[#allocation2 + $0x10] sm:$0xff] %v223
    %240 = vst [vmem:[#allocation2 + $0x18] sm:$0xff] %v225
    %241 = vst [vmem:[#allocation2 + $0x20] sm:$0xff] %v228
    %242 = vst [vmem:[#allocation2 + $0x28] sm:$0xff] %v230
    %243 = vst [vmem:[#allocation2 + $0x30] sm:$0xff] %v233
    %244 = vst [vmem:[#allocation2 + $0x38] sm:$0xff] %v235
    %v245 = vld [vmem:[#allocation11] sm:$0xf]
    %v246 = vld [vmem:[#allocation11 + $0x4] sm:$0xf]
    %v247 = vld [vmem:[#allocation11 + $0x8] sm:$0xf]
    %v248 = vld [vmem:[#allocation11 + $0xc] sm:$0xf]
    %v249 = vld [vmem:[#allocation11 + $0x10] sm:$0xf]
    %v250 = vld [vmem:[#allocation11 + $0x14] sm:$0xf]
    %v251 = vld [vmem:[#allocation11 + $0x18] sm:$0xf]
    %v252 = vld [vmem:[#allocation11 + $0x1c] sm:$0xf]
    %v253 = vld [vmem:[#allocation11 + $0x20] sm:$0xf]
    %v254 = vld [vmem:[#allocation11 + $0x24] sm:$0xf]
    %v255 = vld [vmem:[#allocation11 + $0x28] sm:$0xf]
    %v256 = vld [vmem:[#allocation11 + $0x2c] sm:$0xf]
    %v257 = vld [vmem:[#allocation11 + $0x30] sm:$0xf]
    %v258 = vld [vmem:[#allocation11 + $0x34] sm:$0xf]
    %v259 = vld [vmem:[#allocation11 + $0x38] sm:$0xf]
    %v260 = vld [vmem:[#allocation11 + $0x3c] sm:$0xf]
    %s261 = scalar_lea.vmem [#allocation9], 64
    %v262 = vld [vmem:[%s261] sm:$0xf]
    %v263 = vld [vmem:[%s261 + $0x4] sm:$0xf]
    %v264 = vld [vmem:[%s261 + $0x8] sm:$0xf]
    %v265 = vld [vmem:[%s261 + $0xc] sm:$0xf]
    %v266 = vld [vmem:[%s261 + $0x10] sm:$0xf]
    %v267 = vld [vmem:[%s261 + $0x14] sm:$0xf]
    %v268 = vld [vmem:[%s261 + $0x18] sm:$0xf]
    %v269 = vld [vmem:[%s261 + $0x1c] sm:$0xf]
    %v270 = vld [vmem:[%s261 + $0x20] sm:$0xf]
    %v271 = vld [vmem:[%s261 + $0x24] sm:$0xf]
    %v272 = vld [vmem:[%s261 + $0x28] sm:$0xf]
    %v273 = vld [vmem:[%s261 + $0x2c] sm:$0xf]
    %v274 = vld [vmem:[%s261 + $0x30] sm:$0xf]
    %v275 = vld [vmem:[%s261 + $0x34] sm:$0xf]
    %v276 = vld [vmem:[%s261 + $0x38] sm:$0xf]
    %v277 = vld [vmem:[%s261 + $0x3c] sm:$0xf]
    %s278 = scalar_lea.vmem %s3, 1
    %v279 = vld [vmem:[%s278] sm:$0x1]
    %280 = vst [vmem:[#allocation4] sm:$0xff] 0.0
    %281 = vst [vmem:[#allocation5] sm:$0xff] 0.0
    %v282 = vld [vmem:[#allocation4] sm:$0xff]
    %v283 = vpack.c.bf16 %v282, %v282
    %v284 = vld [vmem:[#allocation2] sm:$0xff]
    %v301 = vunpack.c.l.b16 %v245
    %v302 = vunpack.c.l.b16 %v246
    %v303 = vunpack.c.l.b16 %v247
    %v304 = vunpack.c.l.b16 %v248
    %v305 = vunpack.c.l.b16 %v249
    %v306 = vunpack.c.l.b16 %v250
    %v307 = vunpack.c.l.b16 %v251
    %v308 = vunpack.c.l.b16 %v252
    %v309 = vunpack.c.l.b16 %v253
    %v310 = vunpack.c.l.b16 %v254
    %v311 = vunpack.c.l.b16 %v255
    %v312 = vunpack.c.l.b16 %v256
    %v313 = vunpack.c.l.b16 %v257
    %v314 = vunpack.c.l.b16 %v258
    %v315 = vunpack.c.l.b16 %v259
    %v316 = vunpack.c.l.b16 %v260
    %v317 = vpack.c.b16 %v302, %v301
    %v318 = vpack.c.b16 %v304, %v303
    %v319 = vpack.c.b16 %v306, %v305
    %v320 = vpack.c.b16 %v308, %v307
    %v321 = vpack.c.b16 %v310, %v309
    %v322 = vpack.c.b16 %v312, %v311
    %v323 = vpack.c.b16 %v314, %v313
    %v324 = vpack.c.b16 %v316, %v315
    %333 = vmatpush.bf16.msra.mxu0 %v324
    %334 = vmatpush.bf16.msra.mxu0 %v323
    %335 = vmatpush.bf16.msra.mxu0 %v322
    %336 = vmatpush.bf16.msra.mxu0 %v321
    %337 = vmatpush.bf16.msra.mxu0 %v320
    %338 = vmatpush.bf16.msra.mxu0 %v319
    %339 = vmatpush.bf16.msra.mxu0 %v318
    %340 = vmatpush.bf16.msra.mxu0 %v317
    %341 = vmatmul.bf16.gmra.mxu0 %v283
    %v342 = vpop.f32.mrf.mxu0
    %v343 = vadd.f32 0.0, %v342
    %v344 = vpop.f32.mrf.mxu0
    %345 = vdwg.mxu0
    %v346 = vadd.f32 %v284, %v343
    %v347 = vxor.u32 %v346, 2147483648
    %v348 = vmul.f32 %v347, 1.442695
    %v349 = vpow.pop %v348
    %v350 = vadd.f32 %v349, 1.0
    %v351 = vrcp.pop %v350
    %v352 = vmul.f32 %v350, %v351
    %v353 = vsub.f32 1.0, %v352
    %v354 = vmul.f32 %v351, %v353
    %v355 = vadd.f32 %v351, %v354
    %vm356 = vweird.f32 %v350
    %vm357 = vweird.f32 %v351
    %vm358 = vmor %vm356, %vm357
    %v359 = vsel %vm358, %v351, %v355
    %v360 = vand.u32 2147483647, %v350
    %vm361 = vcmp.eq.f32.partialorder %v360, 8.507059e+37
    %v362 = vand.u32 %v350, 2147483648
    %v363 = vor.u32 1.1754944e-38, %v362
    %v364 = vsel %vm361, %v363, %v359
    %v365 = vmul.f32 1.0, %v364
    %v366 = vtanh.pop %v346
    %367 = vrot.lane.b32.xlu0 %v365, 96
    %v368 = vpop.permute.xlu0 %367
    %369 = vrot.lane.b32.xlu0 %v366, 64
    %v370 = vpop.permute.xlu0 %369
    %371 = vrot.lane.b32.xlu0 %v365, 32
    %v372 = vpop.permute.xlu0 %371
    %v373 = vld [vmem:[#allocation5] sm:$0xff]
    %v374 = vmul.f32 %v368, %v373
    %v375 = vmul.f32 %v365, %v370
    %v376 = vadd.f32 %v374, %v375
    %v377 = vtanh.pop %v376
    %v378 = vmul.f32 %v372, %v377
    %379 = vst [vmem:[#allocation5] sm:$0xff] %v376
    %380 = vst [vmem:[#allocation4] sm:$0xff] %v378
    %v381 = vpack.c.bf16 %v378, %v378
    %v383 = vperm.slane %v279, 0
    %v401 = vunpack.c.l.b16 %v262
    %v402 = vunpack.c.l.b16 %v263
    %v403 = vunpack.c.l.b16 %v264
    %v404 = vunpack.c.l.b16 %v265
    %v405 = vunpack.c.l.b16 %v266
    %v406 = vunpack.c.l.b16 %v267
    %v407 = vunpack.c.l.b16 %v268
    %v408 = vunpack.c.l.b16 %v269
    %v409 = vunpack.c.l.b16 %v270
    %v410 = vunpack.c.l.b16 %v271
    %v411 = vunpack.c.l.b16 %v272
    %v412 = vunpack.c.l.b16 %v273
    %v413 = vunpack.c.l.b16 %v274
    %v414 = vunpack.c.l.b16 %v275
    %v415 = vunpack.c.l.b16 %v276
    %v416 = vunpack.c.l.b16 %v277
    %v417 = vpack.c.b16 %v402, %v401
    %v418 = vpack.c.b16 %v404, %v403
    %v419 = vpack.c.b16 %v406, %v405
    %v420 = vpack.c.b16 %v408, %v407
    %v421 = vpack.c.b16 %v410, %v409
    %v422 = vpack.c.b16 %v412, %v411
    %v423 = vpack.c.b16 %v414, %v413
    %v424 = vpack.c.b16 %v416, %v415
    %433 = vmatpush.bf16.msra.mxu0 %v424
    %434 = vmatpush.bf16.msra.mxu0 %v423
    %435 = vmatpush.bf16.msra.mxu0 %v422
    %436 = vmatpush.bf16.msra.mxu0 %v421
    %437 = vmatpush.bf16.msra.mxu0 %v420
    %438 = vmatpush.bf16.msra.mxu0 %v419
    %439 = vmatpush.bf16.msra.mxu0 %v418
    %440 = vmatpush.bf16.msra.mxu0 %v417
    %441 = vmatmul.bf16.gmra.mxu0 %v381
    %v442 = vpop.f32.mrf.mxu0
    %v443 = vadd.f32 %v383, %v442
    %v444 = vpop.f32.mrf.mxu0
    %445 = vdwg.mxu0
    %446 = vst [vmem:[#allocation3] sm:$0xff] %v443
    %v447 = vld [vmem:[#allocation4] sm:$0xff]
    %v448 = vpack.c.bf16 %v447, %v447
    %v449 = vld [vmem:[#allocation2 + $0x8] sm:$0xff]
    %450 = vmatpush.bf16.msra.mxu0 %v324
    %451 = vmatpush.bf16.msra.mxu0 %v323
    %452 = vmatpush.bf16.msra.mxu0 %v322
    %453 = vmatpush.bf16.msra.mxu0 %v321
    %454 = vmatpush.bf16.msra.mxu0 %v320
    %455 = vmatpush.bf16.msra.mxu0 %v319
    %456 = vmatpush.bf16.msra.mxu0 %v318
    %457 = vmatpush.bf16.msra.mxu0 %v317
    %458 = vmatmul.bf16.gmra.mxu0 %v448
    %v459 = vpop.f32.mrf.mxu0
    %v460 = vadd.f32 0.0, %v459
    %v461 = vpop.f32.mrf.mxu0
    %462 = vdwg.mxu0
    %v463 = vadd.f32 %v449, %v460
    %v464 = vxor.u32 %v463, 2147483648
    %v465 = vmul.f32 %v464, 1.442695
    %v466 = vpow.pop %v465
    %v467 = vadd.f32 %v466, 1.0
    %v468 = vrcp.pop %v467
    %v469 = vmul.f32 %v467, %v468
    %v470 = vsub.f32 1.0, %v469
    %v471 = vmul.f32 %v468, %v470
    %v472 = vadd.f32 %v468, %v471
    %vm473 = vweird.f32 %v467
    %vm474 = vweird.f32 %v468
    %vm475 = vmor %vm473, %vm474
    %v476 = vsel %vm475, %v468, %v472
    %v477 = vand.u32 2147483647, %v467
    %vm478 = vcmp.eq.f32.partialorder %v477, 8.507059e+37
    %v479 = vand.u32 %v467, 2147483648
    %v480 = vor.u32 1.1754944e-38, %v479
    %v481 = vsel %vm478, %v480, %v476
    %v482 = vmul.f32 1.0, %v481
    %v483 = vtanh.pop %v463
    %484 = vrot.lane.b32.xlu0 %v482, 96
    %v485 = vpop.permute.xlu0 %484
    %486 = vrot.lane.b32.xlu0 %v483, 64
    %v487 = vpop.permute.xlu0 %486
    %488 = vrot.lane.b32.xlu0 %v482, 32
    %v489 = vpop.permute.xlu0 %488
    %v490 = vld [vmem:[#allocation5] sm:$0xff]
    %v491 = vmul.f32 %v485, %v490
    %v492 = vmul.f32 %v482, %v487
    %v493 = vadd.f32 %v491, %v492
    %v494 = vtanh.pop %v493
    %v495 = vmul.f32 %v489, %v494
    %496 = vst [vmem:[#allocation5] sm:$0xff] %v493
    %497 = vst [vmem:[#allocation4] sm:$0xff] %v495
    %v498 = vpack.c.bf16 %v495, %v495
    %499 = vmatpush.bf16.msra.mxu0 %v424
    %500 = vmatpush.bf16.msra.mxu0 %v423
    %501 = vmatpush.bf16.msra.mxu0 %v422
    %502 = vmatpush.bf16.msra.mxu0 %v421
    %503 = vmatpush.bf16.msra.mxu0 %v420
    %504 = vmatpush.bf16.msra.mxu0 %v419
    %505 = vmatpush.bf16.msra.mxu0 %v418
    %506 = vmatpush.bf16.msra.mxu0 %v417
    %507 = vmatmul.bf16.gmra.mxu0 %v498
    %v508 = vpop.f32.mrf.mxu0
    %v509 = vadd.f32 %v383, %v508
    %v510 = vpop.f32.mrf.mxu0
    %511 = vdwg.mxu0
    %512 = vst [vmem:[#allocation3 + $0x8] sm:$0xff] %v509
    %v513 = vld [vmem:[#allocation4] sm:$0xff]
    %v514 = vpack.c.bf16 %v513, %v513
    %v515 = vld [vmem:[#allocation2 + $0x10] sm:$0xff]
    %516 = vmatpush.bf16.msra.mxu0 %v324
    %517 = vmatpush.bf16.msra.mxu0 %v323
    %518 = vmatpush.bf16.msra.mxu0 %v322
    %519 = vmatpush.bf16.msra.mxu0 %v321
    %520 = vmatpush.bf16.msra.mxu0 %v320
    %521 = vmatpush.bf16.msra.mxu0 %v319
    %522 = vmatpush.bf16.msra.mxu0 %v318
    %523 = vmatpush.bf16.msra.mxu0 %v317
    %524 = vmatmul.bf16.gmra.mxu0 %v514
    %v525 = vpop.f32.mrf.mxu0
    %v526 = vadd.f32 0.0, %v525
    %v527 = vpop.f32.mrf.mxu0
    %528 = vdwg.mxu0
    %v529 = vadd.f32 %v515, %v526
    %v530 = vxor.u32 %v529, 2147483648
    %v531 = vmul.f32 %v530, 1.442695
    %v532 = vpow.pop %v531
    %v533 = vadd.f32 %v532, 1.0
    %v534 = vrcp.pop %v533
    %v535 = vmul.f32 %v533, %v534
    %v536 = vsub.f32 1.0, %v535
    %v537 = vmul.f32 %v534, %v536
    %v538 = vadd.f32 %v534, %v537
    %vm539 = vweird.f32 %v533
    %vm540 = vweird.f32 %v534
    %vm541 = vmor %vm539, %vm540
    %v542 = vsel %vm541, %v534, %v538
    %v543 = vand.u32 2147483647, %v533
    %vm544 = vcmp.eq.f32.partialorder %v543, 8.507059e+37
    %v545 = vand.u32 %v533, 2147483648
    %v546 = vor.u32 1.1754944e-38, %v545
    %v547 = vsel %vm544, %v546, %v542
    %v548 = vmul.f32 1.0, %v547
    %v549 = vtanh.pop %v529
    %550 = vrot.lane.b32.xlu0 %v548, 96
    %v551 = vpop.permute.xlu0 %550
    %552 = vrot.lane.b32.xlu0 %v549, 64
    %v553 = vpop.permute.xlu0 %552
    %554 = vrot.lane.b32.xlu0 %v548, 32
    %v555 = vpop.permute.xlu0 %554
    %v556 = vld [vmem:[#allocation5] sm:$0xff]
    %v557 = vmul.f32 %v551, %v556
    %v558 = vmul.f32 %v548, %v553
    %v559 = vadd.f32 %v557, %v558
    %v560 = vtanh.pop %v559
    %v561 = vmul.f32 %v555, %v560
    %562 = vst [vmem:[#allocation5] sm:$0xff] %v559
    %563 = vst [vmem:[#allocation4] sm:$0xff] %v561
    %v564 = vpack.c.bf16 %v561, %v561
    %565 = vmatpush.bf16.msra.mxu0 %v424
    %566 = vmatpush.bf16.msra.mxu0 %v423
    %567 = vmatpush.bf16.msra.mxu0 %v422
    %568 = vmatpush.bf16.msra.mxu0 %v421
    %569 = vmatpush.bf16.msra.mxu0 %v420
    %570 = vmatpush.bf16.msra.mxu0 %v419
    %571 = vmatpush.bf16.msra.mxu0 %v418
    %572 = vmatpush.bf16.msra.mxu0 %v417
    %573 = vmatmul.bf16.gmra.mxu0 %v564
    %v574 = vpop.f32.mrf.mxu0
    %v575 = vadd.f32 %v383, %v574
    %v576 = vpop.f32.mrf.mxu0
    %577 = vdwg.mxu0
    %578 = vst [vmem:[#allocation3 + $0x10] sm:$0xff] %v575
    %v579 = vld [vmem:[#allocation4] sm:$0xff]
    %v580 = vpack.c.bf16 %v579, %v579
    %v581 = vld [vmem:[#allocation2 + $0x18] sm:$0xff]
    %582 = vmatpush.bf16.msra.mxu0 %v324
    %583 = vmatpush.bf16.msra.mxu0 %v323
    %584 = vmatpush.bf16.msra.mxu0 %v322
    %585 = vmatpush.bf16.msra.mxu0 %v321
    %586 = vmatpush.bf16.msra.mxu0 %v320
    %587 = vmatpush.bf16.msra.mxu0 %v319
    %588 = vmatpush.bf16.msra.mxu0 %v318
    %589 = vmatpush.bf16.msra.mxu0 %v317
    %590 = vmatmul.bf16.gmra.mxu0 %v580
    %v591 = vpop.f32.mrf.mxu0
    %v592 = vadd.f32 0.0, %v591
    %v593 = vpop.f32.mrf.mxu0
    %594 = vdwg.mxu0
    %v595 = vadd.f32 %v581, %v592
    %v596 = vxor.u32 %v595, 2147483648
    %v597 = vmul.f32 %v596, 1.442695
    %v598 = vpow.pop %v597
    %v599 = vadd.f32 %v598, 1.0
    %v600 = vrcp.pop %v599
    %v601 = vmul.f32 %v599, %v600
    %v602 = vsub.f32 1.0, %v601
    %v603 = vmul.f32 %v600, %v602
    %v604 = vadd.f32 %v600, %v603
    %vm605 = vweird.f32 %v599
    %vm606 = vweird.f32 %v600
    %vm607 = vmor %vm605, %vm606
    %v608 = vsel %vm607, %v600, %v604
    %v609 = vand.u32 2147483647, %v599
    %vm610 = vcmp.eq.f32.partialorder %v609, 8.507059e+37
    %v611 = vand.u32 %v599, 2147483648
    %v612 = vor.u32 1.1754944e-38, %v611
    %v613 = vsel %vm610, %v612, %v608
    %v614 = vmul.f32 1.0, %v613
    %v615 = vtanh.pop %v595
    %616 = vrot.lane.b32.xlu0 %v614, 96
    %v617 = vpop.permute.xlu0 %616
    %618 = vrot.lane.b32.xlu0 %v615, 64
    %v619 = vpop.permute.xlu0 %618
    %620 = vrot.lane.b32.xlu0 %v614, 32
    %v621 = vpop.permute.xlu0 %620
    %v622 = vld [vmem:[#allocation5] sm:$0xff]
    %v623 = vmul.f32 %v617, %v622
    %v624 = vmul.f32 %v614, %v619
    %v625 = vadd.f32 %v623, %v624
    %v626 = vtanh.pop %v625
    %v627 = vmul.f32 %v621, %v626
    %628 = vst [vmem:[#allocation5] sm:$0xff] %v625
    %629 = vst [vmem:[#allocation4] sm:$0xff] %v627
    %v630 = vpack.c.bf16 %v627, %v627
    %631 = vmatpush.bf16.msra.mxu0 %v424
    %632 = vmatpush.bf16.msra.mxu0 %v423
    %633 = vmatpush.bf16.msra.mxu0 %v422
    %634 = vmatpush.bf16.msra.mxu0 %v421
    %635 = vmatpush.bf16.msra.mxu0 %v420
    %636 = vmatpush.bf16.msra.mxu0 %v419
    %637 = vmatpush.bf16.msra.mxu0 %v418
    %638 = vmatpush.bf16.msra.mxu0 %v417
    %639 = vmatmul.bf16.gmra.mxu0 %v630
    %v640 = vpop.f32.mrf.mxu0
    %v641 = vadd.f32 %v383, %v640
    %v642 = vpop.f32.mrf.mxu0
    %643 = vdwg.mxu0
    %644 = vst [vmem:[#allocation3 + $0x18] sm:$0xff] %v641
    %v645 = vld [vmem:[#allocation4] sm:$0xff]
    %v646 = vpack.c.bf16 %v645, %v645
    %v647 = vld [vmem:[#allocation2 + $0x20] sm:$0xff]
    %648 = vmatpush.bf16.msra.mxu0 %v324
    %649 = vmatpush.bf16.msra.mxu0 %v323
    %650 = vmatpush.bf16.msra.mxu0 %v322
    %651 = vmatpush.bf16.msra.mxu0 %v321
    %652 = vmatpush.bf16.msra.mxu0 %v320
    %653 = vmatpush.bf16.msra.mxu0 %v319
    %654 = vmatpush.bf16.msra.mxu0 %v318
    %655 = vmatpush.bf16.msra.mxu0 %v317
    %656 = vmatmul.bf16.gmra.mxu0 %v646
    %v657 = vpop.f32.mrf.mxu0
    %v658 = vadd.f32 0.0, %v657
    %v659 = vpop.f32.mrf.mxu0
    %660 = vdwg.mxu0
    %v661 = vadd.f32 %v647, %v658
    %v662 = vxor.u32 %v661, 2147483648
    %v663 = vmul.f32 %v662, 1.442695
    %v664 = vpow.pop %v663
    %v665 = vadd.f32 %v664, 1.0
    %v666 = vrcp.pop %v665
    %v667 = vmul.f32 %v665, %v666
    %v668 = vsub.f32 1.0, %v667
    %v669 = vmul.f32 %v666, %v668
    %v670 = vadd.f32 %v666, %v669
    %vm671 = vweird.f32 %v665
    %vm672 = vweird.f32 %v666
    %vm673 = vmor %vm671, %vm672
    %v674 = vsel %vm673, %v666, %v670
    %v675 = vand.u32 2147483647, %v665
    %vm676 = vcmp.eq.f32.partialorder %v675, 8.507059e+37
    %v677 = vand.u32 %v665, 2147483648
    %v678 = vor.u32 1.1754944e-38, %v677
    %v679 = vsel %vm676, %v678, %v674
    %v680 = vmul.f32 1.0, %v679
    %v681 = vtanh.pop %v661
    %682 = vrot.lane.b32.xlu0 %v680, 96
    %v683 = vpop.permute.xlu0 %682
    %684 = vrot.lane.b32.xlu0 %v681, 64
    %v685 = vpop.permute.xlu0 %684
    %686 = vrot.lane.b32.xlu0 %v680, 32
    %v687 = vpop.permute.xlu0 %686
    %v688 = vld [vmem:[#allocation5] sm:$0xff]
    %v689 = vmul.f32 %v683, %v688
    %v690 = vmul.f32 %v680, %v685
    %v691 = vadd.f32 %v689, %v690
    %v692 = vtanh.pop %v691
    %v693 = vmul.f32 %v687, %v692
    %694 = vst [vmem:[#allocation5] sm:$0xff] %v691
    %695 = vst [vmem:[#allocation4] sm:$0xff] %v693
    %v696 = vpack.c.bf16 %v693, %v693
    %697 = vmatpush.bf16.msra.mxu0 %v424
    %698 = vmatpush.bf16.msra.mxu0 %v423
    %699 = vmatpush.bf16.msra.mxu0 %v422
    %700 = vmatpush.bf16.msra.mxu0 %v421
    %701 = vmatpush.bf16.msra.mxu0 %v420
    %702 = vmatpush.bf16.msra.mxu0 %v419
    %703 = vmatpush.bf16.msra.mxu0 %v418
    %704 = vmatpush.bf16.msra.mxu0 %v417
    %705 = vmatmul.bf16.gmra.mxu0 %v696
    %v706 = vpop.f32.mrf.mxu0
    %v707 = vadd.f32 %v383, %v706
    %v708 = vpop.f32.mrf.mxu0
    %709 = vdwg.mxu0
    %710 = vst [vmem:[#allocation3 + $0x20] sm:$0xff] %v707
    %v711 = vld [vmem:[#allocation4] sm:$0xff]
    %v712 = vpack.c.bf16 %v711, %v711
    %v713 = vld [vmem:[#allocation2 + $0x28] sm:$0xff]
    %714 = vmatpush.bf16.msra.mxu0 %v324
    %715 = vmatpush.bf16.msra.mxu0 %v323
    %716 = vmatpush.bf16.msra.mxu0 %v322
    %717 = vmatpush.bf16.msra.mxu0 %v321
    %718 = vmatpush.bf16.msra.mxu0 %v320
    %719 = vmatpush.bf16.msra.mxu0 %v319
    %720 = vmatpush.bf16.msra.mxu0 %v318
    %721 = vmatpush.bf16.msra.mxu0 %v317
    %722 = vmatmul.bf16.gmra.mxu0 %v712
    %v723 = vpop.f32.mrf.mxu0
    %v724 = vadd.f32 0.0, %v723
    %v725 = vpop.f32.mrf.mxu0
    %726 = vdwg.mxu0
    %v727 = vadd.f32 %v713, %v724
    %v728 = vxor.u32 %v727, 2147483648
    %v729 = vmul.f32 %v728, 1.442695
    %v730 = vpow.pop %v729
    %v731 = vadd.f32 %v730, 1.0
    %v732 = vrcp.pop %v731
    %v733 = vmul.f32 %v731, %v732
    %v734 = vsub.f32 1.0, %v733
    %v735 = vmul.f32 %v732, %v734
    %v736 = vadd.f32 %v732, %v735
    %vm737 = vweird.f32 %v731
    %vm738 = vweird.f32 %v732
    %vm739 = vmor %vm737, %vm738
    %v740 = vsel %vm739, %v732, %v736
    %v741 = vand.u32 2147483647, %v731
    %vm742 = vcmp.eq.f32.partialorder %v741, 8.507059e+37
    %v743 = vand.u32 %v731, 2147483648
    %v744 = vor.u32 1.1754944e-38, %v743
    %v745 = vsel %vm742, %v744, %v740
    %v746 = vmul.f32 1.0, %v745
    %v747 = vtanh.pop %v727
    %748 = vrot.lane.b32.xlu0 %v746, 96
    %v749 = vpop.permute.xlu0 %748
    %750 = vrot.lane.b32.xlu0 %v747, 64
    %v751 = vpop.permute.xlu0 %750
    %752 = vrot.lane.b32.xlu0 %v746, 32
    %v753 = vpop.permute.xlu0 %752
    %v754 = vld [vmem:[#allocation5] sm:$0xff]
    %v755 = vmul.f32 %v749, %v754
    %v756 = vmul.f32 %v746, %v751
    %v757 = vadd.f32 %v755, %v756
    %v758 = vtanh.pop %v757
    %v759 = vmul.f32 %v753, %v758
    %760 = vst [vmem:[#allocation5] sm:$0xff] %v757
    %761 = vst [vmem:[#allocation4] sm:$0xff] %v759
    %v762 = vpack.c.bf16 %v759, %v759
    %763 = vmatpush.bf16.msra.mxu0 %v424
    %764 = vmatpush.bf16.msra.mxu0 %v423
    %765 = vmatpush.bf16.msra.mxu0 %v422
    %766 = vmatpush.bf16.msra.mxu0 %v421
    %767 = vmatpush.bf16.msra.mxu0 %v420
    %768 = vmatpush.bf16.msra.mxu0 %v419
    %769 = vmatpush.bf16.msra.mxu0 %v418
    %770 = vmatpush.bf16.msra.mxu0 %v417
    %771 = vmatmul.bf16.gmra.mxu0 %v762
    %v772 = vpop.f32.mrf.mxu0
    %v773 = vadd.f32 %v383, %v772
    %v774 = vpop.f32.mrf.mxu0
    %775 = vdwg.mxu0
    %776 = vst [vmem:[#allocation3 + $0x28] sm:$0xff] %v773
    %v777 = vld [vmem:[#allocation4] sm:$0xff]
    %v778 = vpack.c.bf16 %v777, %v777
    %v779 = vld [vmem:[#allocation2 + $0x30] sm:$0xff]
    %780 = vmatpush.bf16.msra.mxu0 %v324
    %781 = vmatpush.bf16.msra.mxu0 %v323
    %782 = vmatpush.bf16.msra.mxu0 %v322
    %783 = vmatpush.bf16.msra.mxu0 %v321
    %784 = vmatpush.bf16.msra.mxu0 %v320
    %785 = vmatpush.bf16.msra.mxu0 %v319
    %786 = vmatpush.bf16.msra.mxu0 %v318
    %787 = vmatpush.bf16.msra.mxu0 %v317
    %788 = vmatmul.bf16.gmra.mxu0 %v778
    %v789 = vpop.f32.mrf.mxu0
    %v790 = vadd.f32 0.0, %v789
    %v791 = vpop.f32.mrf.mxu0
    %792 = vdwg.mxu0
    %v793 = vadd.f32 %v779, %v790
    %v794 = vxor.u32 %v793, 2147483648
    %v795 = vmul.f32 %v794, 1.442695
    %v796 = vpow.pop %v795
    %v797 = vadd.f32 %v796, 1.0
    %v798 = vrcp.pop %v797
    %v799 = vmul.f32 %v797, %v798
    %v800 = vsub.f32 1.0, %v799
    %v801 = vmul.f32 %v798, %v800
    %v802 = vadd.f32 %v798, %v801
    %vm803 = vweird.f32 %v797
    %vm804 = vweird.f32 %v798
    %vm805 = vmor %vm803, %vm804
    %v806 = vsel %vm805, %v798, %v802
    %v807 = vand.u32 2147483647, %v797
    %vm808 = vcmp.eq.f32.partialorder %v807, 8.507059e+37
    %v809 = vand.u32 %v797, 2147483648
    %v810 = vor.u32 1.1754944e-38, %v809
    %v811 = vsel %vm808, %v810, %v806
    %v812 = vmul.f32 1.0, %v811
    %v813 = vtanh.pop %v793
    %814 = vrot.lane.b32.xlu0 %v812, 96
    %v815 = vpop.permute.xlu0 %814
    %816 = vrot.lane.b32.xlu0 %v813, 64
    %v817 = vpop.permute.xlu0 %816
    %818 = vrot.lane.b32.xlu0 %v812, 32
    %v819 = vpop.permute.xlu0 %818
    %v820 = vld [vmem:[#allocation5] sm:$0xff]
    %v821 = vmul.f32 %v815, %v820
    %v822 = vmul.f32 %v812, %v817
    %v823 = vadd.f32 %v821, %v822
    %v824 = vtanh.pop %v823
    %v825 = vmul.f32 %v819, %v824
    %826 = vst [vmem:[#allocation5] sm:$0xff] %v823
    %827 = vst [vmem:[#allocation4] sm:$0xff] %v825
    %v828 = vpack.c.bf16 %v825, %v825
    %829 = vmatpush.bf16.msra.mxu0 %v424
    %830 = vmatpush.bf16.msra.mxu0 %v423
    %831 = vmatpush.bf16.msra.mxu0 %v422
    %832 = vmatpush.bf16.msra.mxu0 %v421
    %833 = vmatpush.bf16.msra.mxu0 %v420
    %834 = vmatpush.bf16.msra.mxu0 %v419
    %835 = vmatpush.bf16.msra.mxu0 %v418
    %836 = vmatpush.bf16.msra.mxu0 %v417
    %837 = vmatmul.bf16.gmra.mxu0 %v828
    %v838 = vpop.f32.mrf.mxu0
    %v839 = vadd.f32 %v383, %v838
    %v840 = vpop.f32.mrf.mxu0
    %841 = vdwg.mxu0
    %842 = vst [vmem:[#allocation3 + $0x30] sm:$0xff] %v839
    %v843 = vld [vmem:[#allocation4] sm:$0xff]
    %v844 = vpack.c.bf16 %v843, %v843
    %v845 = vld [vmem:[#allocation2 + $0x38] sm:$0xff]
    %846 = vmatpush.bf16.msra.mxu0 %v324
    %847 = vmatpush.bf16.msra.mxu0 %v323
    %848 = vmatpush.bf16.msra.mxu0 %v322
    %849 = vmatpush.bf16.msra.mxu0 %v321
    %850 = vmatpush.bf16.msra.mxu0 %v320
    %851 = vmatpush.bf16.msra.mxu0 %v319
    %852 = vmatpush.bf16.msra.mxu0 %v318
    %853 = vmatpush.bf16.msra.mxu0 %v317
    %854 = vmatmul.bf16.gmra.mxu0 %v844
    %v855 = vpop.f32.mrf.mxu0
    %v856 = vadd.f32 0.0, %v855
    %v857 = vpop.f32.mrf.mxu0
    %858 = vdwg.mxu0
    %v859 = vadd.f32 %v845, %v856
    %v860 = vxor.u32 %v859, 2147483648
    %v861 = vmul.f32 %v860, 1.442695
    %v862 = vpow.pop %v861
    %v863 = vadd.f32 %v862, 1.0
    %v864 = vrcp.pop %v863
    %v865 = vmul.f32 %v863, %v864
    %v866 = vsub.f32 1.0, %v865
    %v867 = vmul.f32 %v864, %v866
    %v868 = vadd.f32 %v864, %v867
    %vm869 = vweird.f32 %v863
    %vm870 = vweird.f32 %v864
    %vm871 = vmor %vm869, %vm870
    %v872 = vsel %vm871, %v864, %v868
    %v873 = vand.u32 2147483647, %v863
    %vm874 = vcmp.eq.f32.partialorder %v873, 8.507059e+37
    %v875 = vand.u32 %v863, 2147483648
    %v876 = vor.u32 1.1754944e-38, %v875
    %v877 = vsel %vm874, %v876, %v872
    %v878 = vmul.f32 1.0, %v877
    %v879 = vtanh.pop %v859
    %880 = vrot.lane.b32.xlu0 %v878, 96
    %v881 = vpop.permute.xlu0 %880
    %882 = vrot.lane.b32.xlu0 %v879, 64
    %v883 = vpop.permute.xlu0 %882
    %884 = vrot.lane.b32.xlu0 %v878, 32
    %v885 = vpop.permute.xlu0 %884
    %v886 = vld [vmem:[#allocation5] sm:$0xff]
    %v887 = vmul.f32 %v881, %v886
    %v888 = vmul.f32 %v878, %v883
    %v889 = vadd.f32 %v887, %v888
    %v890 = vtanh.pop %v889
    %v891 = vmul.f32 %v885, %v890
    %892 = vst [vmem:[#allocation5] sm:$0xff] %v889
    %893 = vst [vmem:[#allocation4] sm:$0xff] %v891
    %v894 = vpack.c.bf16 %v891, %v891
    %895 = vmatpush.bf16.msra.mxu0 %v424
    %896 = vmatpush.bf16.msra.mxu0 %v423
    %897 = vmatpush.bf16.msra.mxu0 %v422
    %898 = vmatpush.bf16.msra.mxu0 %v421
    %899 = vmatpush.bf16.msra.mxu0 %v420
    %900 = vmatpush.bf16.msra.mxu0 %v419
    %901 = vmatpush.bf16.msra.mxu0 %v418
    %902 = vmatpush.bf16.msra.mxu0 %v417
    %903 = vmatmul.bf16.gmra.mxu0 %v894
    %v904 = vpop.f32.mrf.mxu0
    %v905 = vadd.f32 %v383, %v904
    %v906 = vpop.f32.mrf.mxu0
    %907 = vdwg.mxu0
    %908 = vst [vmem:[#allocation3 + $0x38] sm:$0xff] %v905
    %s909 = scalar_lea.vmem [#allocation11], 64
    %v910 = vld [vmem:[%s909] sm:$0xf]
    %v911 = vld [vmem:[%s909 + $0x4] sm:$0xf]
    %v912 = vld [vmem:[%s909 + $0x8] sm:$0xf]
    %v913 = vld [vmem:[%s909 + $0xc] sm:$0xf]
    %v914 = vld [vmem:[%s909 + $0x10] sm:$0xf]
    %v915 = vld [vmem:[%s909 + $0x14] sm:$0xf]
    %v916 = vld [vmem:[%s909 + $0x18] sm:$0xf]
    %v917 = vld [vmem:[%s909 + $0x1c] sm:$0xf]
    %v918 = vld [vmem:[%s909 + $0x20] sm:$0xf]
    %v919 = vld [vmem:[%s909 + $0x24] sm:$0xf]
    %v920 = vld [vmem:[%s909 + $0x28] sm:$0xf]
    %v921 = vld [vmem:[%s909 + $0x2c] sm:$0xf]
    %v922 = vld [vmem:[%s909 + $0x30] sm:$0xf]
    %v923 = vld [vmem:[%s909 + $0x34] sm:$0xf]
    %v924 = vld [vmem:[%s909 + $0x38] sm:$0xf]
    %v925 = vld [vmem:[%s909 + $0x3c] sm:$0xf]
    %926 = vst [vmem:[#allocation4] sm:$0xff] 0.0
    %927 = vst [vmem:[#allocation5] sm:$0xff] 0.0
    %v928 = vld [vmem:[#allocation4] sm:$0xff]
    %v929 = vpack.c.bf16 %v928, %v928
    %v930 = vld [vmem:[#allocation3] sm:$0xff]
    %v947 = vunpack.c.l.b16 %v910
    %v948 = vunpack.c.l.b16 %v911
    %v949 = vunpack.c.l.b16 %v912
    %v950 = vunpack.c.l.b16 %v913
    %v951 = vunpack.c.l.b16 %v914
    %v952 = vunpack.c.l.b16 %v915
    %v953 = vunpack.c.l.b16 %v916
    %v954 = vunpack.c.l.b16 %v917
    %v955 = vunpack.c.l.b16 %v918
    %v956 = vunpack.c.l.b16 %v919
    %v957 = vunpack.c.l.b16 %v920
    %v958 = vunpack.c.l.b16 %v921
    %v959 = vunpack.c.l.b16 %v922
    %v960 = vunpack.c.l.b16 %v923
    %v961 = vunpack.c.l.b16 %v924
    %v962 = vunpack.c.l.b16 %v925
    %v963 = vpack.c.b16 %v948, %v947
    %v964 = vpack.c.b16 %v950, %v949
    %v965 = vpack.c.b16 %v952, %v951
    %v966 = vpack.c.b16 %v954, %v953
    %v967 = vpack.c.b16 %v956, %v955
    %v968 = vpack.c.b16 %v958, %v957
    %v969 = vpack.c.b16 %v960, %v959
    %v970 = vpack.c.b16 %v962, %v961
    %979 = vmatpush.bf16.msra.mxu0 %v970
    %980 = vmatpush.bf16.msra.mxu0 %v969
    %981 = vmatpush.bf16.msra.mxu0 %v968
    %982 = vmatpush.bf16.msra.mxu0 %v967
    %983 = vmatpush.bf16.msra.mxu0 %v966
    %984 = vmatpush.bf16.msra.mxu0 %v965
    %985 = vmatpush.bf16.msra.mxu0 %v964
    %986 = vmatpush.bf16.msra.mxu0 %v963
    %987 = vmatmul.bf16.gmra.mxu0 %v929
    %v988 = vpop.f32.mrf.mxu0
    %v989 = vadd.f32 0.0, %v988
    %v990 = vpop.f32.mrf.mxu0
    %991 = vdwg.mxu0
    %v992 = vadd.f32 %v930, %v989
    %v993 = vxor.u32 %v992, 2147483648
    %v994 = vmul.f32 %v993, 1.442695
    %v995 = vpow.pop %v994
    %v996 = vadd.f32 %v995, 1.0
    %v997 = vrcp.pop %v996
    %v998 = vmul.f32 %v996, %v997
    %v999 = vsub.f32 1.0, %v998
    %v1000 = vmul.f32 %v997, %v999
    %v1001 = vadd.f32 %v997, %v1000
    %vm1002 = vweird.f32 %v996
    %vm1003 = vweird.f32 %v997
    %vm1004 = vmor %vm1002, %vm1003
    %v1005 = vsel %vm1004, %v997, %v1001
    %v1006 = vand.u32 2147483647, %v996
    %vm1007 = vcmp.eq.f32.partialorder %v1006, 8.507059e+37
    %v1008 = vand.u32 %v996, 2147483648
    %v1009 = vor.u32 1.1754944e-38, %v1008
    %v1010 = vsel %vm1007, %v1009, %v1005
    %v1011 = vmul.f32 1.0, %v1010
    %v1012 = vtanh.pop %v992
    %1013 = vrot.lane.b32.xlu0 %v1011, 96
    %v1014 = vpop.permute.xlu0 %1013
    %1015 = vrot.lane.b32.xlu0 %v1012, 64
    %v1016 = vpop.permute.xlu0 %1015
    %1017 = vrot.lane.b32.xlu0 %v1011, 32
    %v1018 = vpop.permute.xlu0 %1017
    %v1019 = vld [vmem:[#allocation5] sm:$0xff]
    %v1020 = vmul.f32 %v1014, %v1019
    %v1021 = vmul.f32 %v1011, %v1016
    %v1022 = vadd.f32 %v1020, %v1021
    %v1023 = vtanh.pop %v1022
    %v1024 = vmul.f32 %v1018, %v1023
    %1025 = vst [vmem:[#allocation5] sm:$0xff] %v1022
    %1026 = vst [vmem:[#allocation4] sm:$0xff] %v1024
    %v1027 = vld [vmem:[#allocation4] sm:$0xff]
    %v1028 = vpack.c.bf16 %v1027, %v1027
    %v1029 = vld [vmem:[#allocation3 + $0x8] sm:$0xff]
    %1030 = vmatpush.bf16.msra.mxu0 %v970
    %1031 = vmatpush.bf16.msra.mxu0 %v969
    %1032 = vmatpush.bf16.msra.mxu0 %v968
    %1033 = vmatpush.bf16.msra.mxu0 %v967
    %1034 = vmatpush.bf16.msra.mxu0 %v966
    %1035 = vmatpush.bf16.msra.mxu0 %v965
    %1036 = vmatpush.bf16.msra.mxu0 %v964
    %1037 = vmatpush.bf16.msra.mxu0 %v963
    %1038 = vmatmul.bf16.gmra.mxu0 %v1028
    %v1039 = vpop.f32.mrf.mxu0
    %v1040 = vadd.f32 0.0, %v1039
    %v1041 = vpop.f32.mrf.mxu0
    %1042 = vdwg.mxu0
    %v1043 = vadd.f32 %v1029, %v1040
    %v1044 = vxor.u32 %v1043, 2147483648
    %v1045 = vmul.f32 %v1044, 1.442695
    %v1046 = vpow.pop %v1045
    %v1047 = vadd.f32 %v1046, 1.0
    %v1048 = vrcp.pop %v1047
    %v1049 = vmul.f32 %v1047, %v1048
    %v1050 = vsub.f32 1.0, %v1049
    %v1051 = vmul.f32 %v1048, %v1050
    %v1052 = vadd.f32 %v1048, %v1051
    %vm1053 = vweird.f32 %v1047
    %vm1054 = vweird.f32 %v1048
    %vm1055 = vmor %vm1053, %vm1054
    %v1056 = vsel %vm1055, %v1048, %v1052
    %v1057 = vand.u32 2147483647, %v1047
    %vm1058 = vcmp.eq.f32.partialorder %v1057, 8.507059e+37
    %v1059 = vand.u32 %v1047, 2147483648
    %v1060 = vor.u32 1.1754944e-38, %v1059
    %v1061 = vsel %vm1058, %v1060, %v1056
    %v1062 = vmul.f32 1.0, %v1061
    %v1063 = vtanh.pop %v1043
    %1064 = vrot.lane.b32.xlu0 %v1062, 96
    %v1065 = vpop.permute.xlu0 %1064
    %1066 = vrot.lane.b32.xlu0 %v1063, 64
    %v1067 = vpop.permute.xlu0 %1066
    %1068 = vrot.lane.b32.xlu0 %v1062, 32
    %v1069 = vpop.permute.xlu0 %1068
    %v1070 = vld [vmem:[#allocation5] sm:$0xff]
    %v1071 = vmul.f32 %v1065, %v1070
    %v1072 = vmul.f32 %v1062, %v1067
    %v1073 = vadd.f32 %v1071, %v1072
    %v1074 = vtanh.pop %v1073
    %v1075 = vmul.f32 %v1069, %v1074
    %1076 = vst [vmem:[#allocation5] sm:$0xff] %v1073
    %1077 = vst [vmem:[#allocation4] sm:$0xff] %v1075
    %v1078 = vld [vmem:[#allocation4] sm:$0xff]
    %v1079 = vpack.c.bf16 %v1078, %v1078
    %v1080 = vld [vmem:[#allocation3 + $0x10] sm:$0xff]
    %1081 = vmatpush.bf16.msra.mxu0 %v970
    %1082 = vmatpush.bf16.msra.mxu0 %v969
    %1083 = vmatpush.bf16.msra.mxu0 %v968
    %1084 = vmatpush.bf16.msra.mxu0 %v967
    %1085 = vmatpush.bf16.msra.mxu0 %v966
    %1086 = vmatpush.bf16.msra.mxu0 %v965
    %1087 = vmatpush.bf16.msra.mxu0 %v964
    %1088 = vmatpush.bf16.msra.mxu0 %v963
    %1089 = vmatmul.bf16.gmra.mxu0 %v1079
    %v1090 = vpop.f32.mrf.mxu0
    %v1091 = vadd.f32 0.0, %v1090
    %v1092 = vpop.f32.mrf.mxu0
    %1093 = vdwg.mxu0
    %v1094 = vadd.f32 %v1080, %v1091
    %v1095 = vxor.u32 %v1094, 2147483648
    %v1096 = vmul.f32 %v1095, 1.442695
    %v1097 = vpow.pop %v1096
    %v1098 = vadd.f32 %v1097, 1.0
    %v1099 = vrcp.pop %v1098
    %v1100 = vmul.f32 %v1098, %v1099
    %v1101 = vsub.f32 1.0, %v1100
    %v1102 = vmul.f32 %v1099, %v1101
    %v1103 = vadd.f32 %v1099, %v1102
    %vm1104 = vweird.f32 %v1098
    %vm1105 = vweird.f32 %v1099
    %vm1106 = vmor %vm1104, %vm1105
    %v1107 = vsel %vm1106, %v1099, %v1103
    %v1108 = vand.u32 2147483647, %v1098
    %vm1109 = vcmp.eq.f32.partialorder %v1108, 8.507059e+37
    %v1110 = vand.u32 %v1098, 2147483648
    %v1111 = vor.u32 1.1754944e-38, %v1110
    %v1112 = vsel %vm1109, %v1111, %v1107
    %v1113 = vmul.f32 1.0, %v1112
    %v1114 = vtanh.pop %v1094
    %1115 = vrot.lane.b32.xlu0 %v1113, 96
    %v1116 = vpop.permute.xlu0 %1115
    %1117 = vrot.lane.b32.xlu0 %v1114, 64
    %v1118 = vpop.permute.xlu0 %1117
    %1119 = vrot.lane.b32.xlu0 %v1113, 32
    %v1120 = vpop.permute.xlu0 %1119
    %v1121 = vld [vmem:[#allocation5] sm:$0xff]
    %v1122 = vmul.f32 %v1116, %v1121
    %v1123 = vmul.f32 %v1113, %v1118
    %v1124 = vadd.f32 %v1122, %v1123
    %v1125 = vtanh.pop %v1124
    %v1126 = vmul.f32 %v1120, %v1125
    %1127 = vst [vmem:[#allocation5] sm:$0xff] %v1124
    %1128 = vst [vmem:[#allocation4] sm:$0xff] %v1126
    %v1129 = vld [vmem:[#allocation4] sm:$0xff]
    %v1130 = vpack.c.bf16 %v1129, %v1129
    %v1131 = vld [vmem:[#allocation3 + $0x18] sm:$0xff]
    %1132 = vmatpush.bf16.msra.mxu0 %v970
    %1133 = vmatpush.bf16.msra.mxu0 %v969
    %1134 = vmatpush.bf16.msra.mxu0 %v968
    %1135 = vmatpush.bf16.msra.mxu0 %v967
    %1136 = vmatpush.bf16.msra.mxu0 %v966
    %1137 = vmatpush.bf16.msra.mxu0 %v965
    %1138 = vmatpush.bf16.msra.mxu0 %v964
    %1139 = vmatpush.bf16.msra.mxu0 %v963
    %1140 = vmatmul.bf16.gmra.mxu0 %v1130
    %v1141 = vpop.f32.mrf.mxu0
    %v1142 = vadd.f32 0.0, %v1141
    %v1143 = vpop.f32.mrf.mxu0
    %1144 = vdwg.mxu0
    %v1145 = vadd.f32 %v1131, %v1142
    %v1146 = vxor.u32 %v1145, 2147483648
    %v1147 = vmul.f32 %v1146, 1.442695
    %v1148 = vpow.pop %v1147
    %v1149 = vadd.f32 %v1148, 1.0
    %v1150 = vrcp.pop %v1149
    %v1151 = vmul.f32 %v1149, %v1150
    %v1152 = vsub.f32 1.0, %v1151
    %v1153 = vmul.f32 %v1150, %v1152
    %v1154 = vadd.f32 %v1150, %v1153
    %vm1155 = vweird.f32 %v1149
    %vm1156 = vweird.f32 %v1150
    %vm1157 = vmor %vm1155, %vm1156
    %v1158 = vsel %vm1157, %v1150, %v1154
    %v1159 = vand.u32 2147483647, %v1149
    %vm1160 = vcmp.eq.f32.partialorder %v1159, 8.507059e+37
    %v1161 = vand.u32 %v1149, 2147483648
    %v1162 = vor.u32 1.1754944e-38, %v1161
    %v1163 = vsel %vm1160, %v1162, %v1158
    %v1164 = vmul.f32 1.0, %v1163
    %v1165 = vtanh.pop %v1145
    %1166 = vrot.lane.b32.xlu0 %v1164, 96
    %v1167 = vpop.permute.xlu0 %1166
    %1168 = vrot.lane.b32.xlu0 %v1165, 64
    %v1169 = vpop.permute.xlu0 %1168
    %1170 = vrot.lane.b32.xlu0 %v1164, 32
    %v1171 = vpop.permute.xlu0 %1170
    %v1172 = vld [vmem:[#allocation5] sm:$0xff]
    %v1173 = vmul.f32 %v1167, %v1172
    %v1174 = vmul.f32 %v1164, %v1169
    %v1175 = vadd.f32 %v1173, %v1174
    %v1176 = vtanh.pop %v1175
    %v1177 = vmul.f32 %v1171, %v1176
    %1178 = vst [vmem:[#allocation5] sm:$0xff] %v1175
    %1179 = vst [vmem:[#allocation4] sm:$0xff] %v1177
    %v1180 = vld [vmem:[#allocation4] sm:$0xff]
    %v1181 = vpack.c.bf16 %v1180, %v1180
    %v1182 = vld [vmem:[#allocation3 + $0x20] sm:$0xff]
    %1183 = vmatpush.bf16.msra.mxu0 %v970
    %1184 = vmatpush.bf16.msra.mxu0 %v969
    %1185 = vmatpush.bf16.msra.mxu0 %v968
    %1186 = vmatpush.bf16.msra.mxu0 %v967
    %1187 = vmatpush.bf16.msra.mxu0 %v966
    %1188 = vmatpush.bf16.msra.mxu0 %v965
    %1189 = vmatpush.bf16.msra.mxu0 %v964
    %1190 = vmatpush.bf16.msra.mxu0 %v963
    %1191 = vmatmul.bf16.gmra.mxu0 %v1181
    %v1192 = vpop.f32.mrf.mxu0
    %v1193 = vadd.f32 0.0, %v1192
    %v1194 = vpop.f32.mrf.mxu0
    %1195 = vdwg.mxu0
    %v1196 = vadd.f32 %v1182, %v1193
    %v1197 = vxor.u32 %v1196, 2147483648
    %v1198 = vmul.f32 %v1197, 1.442695
    %v1199 = vpow.pop %v1198
    %v1200 = vadd.f32 %v1199, 1.0
    %v1201 = vrcp.pop %v1200
    %v1202 = vmul.f32 %v1200, %v1201
    %v1203 = vsub.f32 1.0, %v1202
    %v1204 = vmul.f32 %v1201, %v1203
    %v1205 = vadd.f32 %v1201, %v1204
    %vm1206 = vweird.f32 %v1200
    %vm1207 = vweird.f32 %v1201
    %vm1208 = vmor %vm1206, %vm1207
    %v1209 = vsel %vm1208, %v1201, %v1205
    %v1210 = vand.u32 2147483647, %v1200
    %vm1211 = vcmp.eq.f32.partialorder %v1210, 8.507059e+37
    %v1212 = vand.u32 %v1200, 2147483648
    %v1213 = vor.u32 1.1754944e-38, %v1212
    %v1214 = vsel %vm1211, %v1213, %v1209
    %v1215 = vmul.f32 1.0, %v1214
    %v1216 = vtanh.pop %v1196
    %1217 = vrot.lane.b32.xlu0 %v1215, 96
    %v1218 = vpop.permute.xlu0 %1217
    %1219 = vrot.lane.b32.xlu0 %v1216, 64
    %v1220 = vpop.permute.xlu0 %1219
    %1221 = vrot.lane.b32.xlu0 %v1215, 32
    %v1222 = vpop.permute.xlu0 %1221
    %v1223 = vld [vmem:[#allocation5] sm:$0xff]
    %v1224 = vmul.f32 %v1218, %v1223
    %v1225 = vmul.f32 %v1215, %v1220
    %v1226 = vadd.f32 %v1224, %v1225
    %v1227 = vtanh.pop %v1226
    %v1228 = vmul.f32 %v1222, %v1227
    %1229 = vst [vmem:[#allocation5] sm:$0xff] %v1226
    %1230 = vst [vmem:[#allocation4] sm:$0xff] %v1228
    %v1231 = vld [vmem:[#allocation4] sm:$0xff]
    %v1232 = vpack.c.bf16 %v1231, %v1231
    %v1233 = vld [vmem:[#allocation3 + $0x28] sm:$0xff]
    %1234 = vmatpush.bf16.msra.mxu0 %v970
    %1235 = vmatpush.bf16.msra.mxu0 %v969
    %1236 = vmatpush.bf16.msra.mxu0 %v968
    %1237 = vmatpush.bf16.msra.mxu0 %v967
    %1238 = vmatpush.bf16.msra.mxu0 %v966
    %1239 = vmatpush.bf16.msra.mxu0 %v965
    %1240 = vmatpush.bf16.msra.mxu0 %v964
    %1241 = vmatpush.bf16.msra.mxu0 %v963
    %1242 = vmatmul.bf16.gmra.mxu0 %v1232
    %v1243 = vpop.f32.mrf.mxu0
    %v1244 = vadd.f32 0.0, %v1243
    %v1245 = vpop.f32.mrf.mxu0
    %1246 = vdwg.mxu0
    %v1247 = vadd.f32 %v1233, %v1244
    %v1248 = vxor.u32 %v1247, 2147483648
    %v1249 = vmul.f32 %v1248, 1.442695
    %v1250 = vpow.pop %v1249
    %v1251 = vadd.f32 %v1250, 1.0
    %v1252 = vrcp.pop %v1251
    %v1253 = vmul.f32 %v1251, %v1252
    %v1254 = vsub.f32 1.0, %v1253
    %v1255 = vmul.f32 %v1252, %v1254
    %v1256 = vadd.f32 %v1252, %v1255
    %vm1257 = vweird.f32 %v1251
    %vm1258 = vweird.f32 %v1252
    %vm1259 = vmor %vm1257, %vm1258
    %v1260 = vsel %vm1259, %v1252, %v1256
    %v1261 = vand.u32 2147483647, %v1251
    %vm1262 = vcmp.eq.f32.partialorder %v1261, 8.507059e+37
    %v1263 = vand.u32 %v1251, 2147483648
    %v1264 = vor.u32 1.1754944e-38, %v1263
    %v1265 = vsel %vm1262, %v1264, %v1260
    %v1266 = vmul.f32 1.0, %v1265
    %v1267 = vtanh.pop %v1247
    %1268 = vrot.lane.b32.xlu0 %v1266, 96
    %v1269 = vpop.permute.xlu0 %1268
    %1270 = vrot.lane.b32.xlu0 %v1267, 64
    %v1271 = vpop.permute.xlu0 %1270
    %1272 = vrot.lane.b32.xlu0 %v1266, 32
    %v1273 = vpop.permute.xlu0 %1272
    %v1274 = vld [vmem:[#allocation5] sm:$0xff]
    %v1275 = vmul.f32 %v1269, %v1274
    %v1276 = vmul.f32 %v1266, %v1271
    %v1277 = vadd.f32 %v1275, %v1276
    %v1278 = vtanh.pop %v1277
    %v1279 = vmul.f32 %v1273, %v1278
    %1280 = vst [vmem:[#allocation5] sm:$0xff] %v1277
    %1281 = vst [vmem:[#allocation4] sm:$0xff] %v1279
    %v1282 = vld [vmem:[#allocation4] sm:$0xff]
    %v1283 = vpack.c.bf16 %v1282, %v1282
    %v1284 = vld [vmem:[#allocation3 + $0x30] sm:$0xff]
    %1285 = vmatpush.bf16.msra.mxu0 %v970
    %1286 = vmatpush.bf16.msra.mxu0 %v969
    %1287 = vmatpush.bf16.msra.mxu0 %v968
    %1288 = vmatpush.bf16.msra.mxu0 %v967
    %1289 = vmatpush.bf16.msra.mxu0 %v966
    %1290 = vmatpush.bf16.msra.mxu0 %v965
    %1291 = vmatpush.bf16.msra.mxu0 %v964
    %1292 = vmatpush.bf16.msra.mxu0 %v963
    %1293 = vmatmul.bf16.gmra.mxu0 %v1283
    %v1294 = vpop.f32.mrf.mxu0
    %v1295 = vadd.f32 0.0, %v1294
    %v1296 = vpop.f32.mrf.mxu0
    %1297 = vdwg.mxu0
    %v1298 = vadd.f32 %v1284, %v1295
    %v1299 = vxor.u32 %v1298, 2147483648
    %v1300 = vmul.f32 %v1299, 1.442695
    %v1301 = vpow.pop %v1300
    %v1302 = vadd.f32 %v1301, 1.0
    %v1303 = vrcp.pop %v1302
    %v1304 = vmul.f32 %v1302, %v1303
    %v1305 = vsub.f32 1.0, %v1304
    %v1306 = vmul.f32 %v1303, %v1305
    %v1307 = vadd.f32 %v1303, %v1306
    %vm1308 = vweird.f32 %v1302
    %vm1309 = vweird.f32 %v1303
    %vm1310 = vmor %vm1308, %vm1309
    %v1311 = vsel %vm1310, %v1303, %v1307
    %v1312 = vand.u32 2147483647, %v1302
    %vm1313 = vcmp.eq.f32.partialorder %v1312, 8.507059e+37
    %v1314 = vand.u32 %v1302, 2147483648
    %v1315 = vor.u32 1.1754944e-38, %v1314
    %v1316 = vsel %vm1313, %v1315, %v1311
    %v1317 = vmul.f32 1.0, %v1316
    %v1318 = vtanh.pop %v1298
    %1319 = vrot.lane.b32.xlu0 %v1317, 96
    %v1320 = vpop.permute.xlu0 %1319
    %1321 = vrot.lane.b32.xlu0 %v1318, 64
    %v1322 = vpop.permute.xlu0 %1321
    %1323 = vrot.lane.b32.xlu0 %v1317, 32
    %v1324 = vpop.permute.xlu0 %1323
    %v1325 = vld [vmem:[#allocation5] sm:$0xff]
    %v1326 = vmul.f32 %v1320, %v1325
    %v1327 = vmul.f32 %v1317, %v1322
    %v1328 = vadd.f32 %v1326, %v1327
    %v1329 = vtanh.pop %v1328
    %v1330 = vmul.f32 %v1324, %v1329
    %1331 = vst [vmem:[#allocation5] sm:$0xff] %v1328
    %1332 = vst [vmem:[#allocation4] sm:$0xff] %v1330
    %v1333 = vld [vmem:[#allocation4] sm:$0xff]
    %v1334 = vpack.c.bf16 %v1333, %v1333
    %v1335 = vld [vmem:[#allocation3 + $0x38] sm:$0xff]
    %1336 = vmatpush.bf16.msra.mxu0 %v970
    %1337 = vmatpush.bf16.msra.mxu0 %v969
    %1338 = vmatpush.bf16.msra.mxu0 %v968
    %1339 = vmatpush.bf16.msra.mxu0 %v967
    %1340 = vmatpush.bf16.msra.mxu0 %v966
    %1341 = vmatpush.bf16.msra.mxu0 %v965
    %1342 = vmatpush.bf16.msra.mxu0 %v964
    %1343 = vmatpush.bf16.msra.mxu0 %v963
    %1344 = vmatmul.bf16.gmra.mxu0 %v1334
    %v1345 = vpop.f32.mrf.mxu0
    %v1346 = vadd.f32 0.0, %v1345
    %v1347 = vpop.f32.mrf.mxu0
    %1348 = vdwg.mxu0
    %v1349 = vadd.f32 %v1335, %v1346
    %v1350 = vxor.u32 %v1349, 2147483648
    %v1351 = vmul.f32 %v1350, 1.442695
    %v1352 = vpow.pop %v1351
    %v1353 = vadd.f32 %v1352, 1.0
    %v1354 = vrcp.pop %v1353
    %v1355 = vmul.f32 %v1353, %v1354
    %v1356 = vsub.f32 1.0, %v1355
    %v1357 = vmul.f32 %v1354, %v1356
    %v1358 = vadd.f32 %v1354, %v1357
    %vm1359 = vweird.f32 %v1353
    %vm1360 = vweird.f32 %v1354
    %vm1361 = vmor %vm1359, %vm1360
    %v1362 = vsel %vm1361, %v1354, %v1358
    %v1363 = vand.u32 2147483647, %v1353
    %vm1364 = vcmp.eq.f32.partialorder %v1363, 8.507059e+37
    %v1365 = vand.u32 %v1353, 2147483648
    %v1366 = vor.u32 1.1754944e-38, %v1365
    %v1367 = vsel %vm1364, %v1366, %v1362
    %v1368 = vmul.f32 1.0, %v1367
    %v1369 = vtanh.pop %v1349
    %1370 = vrot.lane.b32.xlu0 %v1368, 96
    %v1371 = vpop.permute.xlu0 %1370
    %1372 = vrot.lane.b32.xlu0 %v1369, 64
    %v1373 = vpop.permute.xlu0 %1372
    %1374 = vrot.lane.b32.xlu0 %v1368, 32
    %v1375 = vpop.permute.xlu0 %1374
    %v1376 = vld [vmem:[#allocation5] sm:$0xff]
    %v1377 = vmul.f32 %v1371, %v1376
    %v1378 = vmul.f32 %v1368, %v1373
    %v1379 = vadd.f32 %v1377, %v1378
    %v1380 = vtanh.pop %v1379
    %v1381 = vmul.f32 %v1375, %v1380
    %1382 = vst [vmem:[#allocation5] sm:$0xff] %v1379
    %1383 = vst [vmem:[#allocation4] sm:$0xff] %v1381
    %v1384 = vld [vmem:[#allocation4] sm:$0xff]
    %v1385 = vpack.c.bf16 %v1384, %v1384
    %v1386 = vld [vmem:[#allocation12] sm:$0xf]
    %v1387 = vld [vmem:[#allocation12 + $0x4] sm:$0xf]
    %v1388 = vld [vmem:[#allocation12 + $0x8] sm:$0xf]
    %v1389 = vld [vmem:[#allocation12 + $0xc] sm:$0xf]
    %v1390 = vld [vmem:[#allocation12 + $0x10] sm:$0xf]
    %v1391 = vld [vmem:[#allocation12 + $0x14] sm:$0xf]
    %v1392 = vld [vmem:[#allocation12 + $0x18] sm:$0xf]
    %v1393 = vld [vmem:[#allocation12 + $0x1c] sm:$0xf]
    %v1394 = vld [vmem:[#allocation12 + $0x20] sm:$0xf]
    %v1395 = vld [vmem:[#allocation12 + $0x24] sm:$0xf]
    %v1396 = vld [vmem:[#allocation12 + $0x28] sm:$0xf]
    %v1397 = vld [vmem:[#allocation12 + $0x2c] sm:$0xf]
    %v1398 = vld [vmem:[#allocation12 + $0x30] sm:$0xf]
    %v1399 = vld [vmem:[#allocation12 + $0x34] sm:$0xf]
    %v1400 = vld [vmem:[#allocation12 + $0x38] sm:$0xf]
    %v1401 = vld [vmem:[#allocation12 + $0x3c] sm:$0xf]
    %v1402 = vld [vmem:[%s5] sm:$0x1]
    %v1404 = vperm.slane %v1402, 0
    %v1422 = vunpack.c.l.b16 %v1386
    %v1423 = vunpack.c.l.b16 %v1387
    %v1424 = vunpack.c.l.b16 %v1388
    %v1425 = vunpack.c.l.b16 %v1389
    %v1426 = vunpack.c.l.b16 %v1390
    %v1427 = vunpack.c.l.b16 %v1391
    %v1428 = vunpack.c.l.b16 %v1392
    %v1429 = vunpack.c.l.b16 %v1393
    %v1430 = vunpack.c.l.b16 %v1394
    %v1431 = vunpack.c.l.b16 %v1395
    %v1432 = vunpack.c.l.b16 %v1396
    %v1433 = vunpack.c.l.b16 %v1397
    %v1434 = vunpack.c.l.b16 %v1398
    %v1435 = vunpack.c.l.b16 %v1399
    %v1436 = vunpack.c.l.b16 %v1400
    %v1437 = vunpack.c.l.b16 %v1401
    %v1438 = vpack.c.b16 %v1423, %v1422
    %v1439 = vpack.c.b16 %v1425, %v1424
    %v1440 = vpack.c.b16 %v1427, %v1426
    %v1441 = vpack.c.b16 %v1429, %v1428
    %v1442 = vpack.c.b16 %v1431, %v1430
    %v1443 = vpack.c.b16 %v1433, %v1432
    %v1444 = vpack.c.b16 %v1435, %v1434
    %v1445 = vpack.c.b16 %v1437, %v1436
    %1454 = vmatpush.bf16.msra.mxu0 %v1445
    %1455 = vmatpush.bf16.msra.mxu0 %v1444
    %1456 = vmatpush.bf16.msra.mxu0 %v1443
    %1457 = vmatpush.bf16.msra.mxu0 %v1442
    %1458 = vmatpush.bf16.msra.mxu0 %v1441
    %1459 = vmatpush.bf16.msra.mxu0 %v1440
    %1460 = vmatpush.bf16.msra.mxu0 %v1439
    %1461 = vmatpush.bf16.msra.mxu0 %v1438
    %1462 = vmatmul.bf16.gmra.mxu0 %v1385
    %v1463 = vpop.f32.mrf.mxu0
    %v1464 = vadd.f32 %v1404, %v1463
    %v1465 = vpop.f32.mrf.mxu0
    %1466 = vdwg.mxu0
    %v1467 = vpack.c.bf16 %v1464, %v1464
    %v1468 = vld [vmem:[#allocation14] sm:$0xf]
    %v1469 = vld [vmem:[#allocation14 + $0x4] sm:$0xf]
    %v1470 = vld [vmem:[#allocation14 + $0x8] sm:$0xf]
    %v1471 = vld [vmem:[#allocation14 + $0xc] sm:$0xf]
    %v1472 = vld [vmem:[#allocation14 + $0x10] sm:$0xf]
    %v1473 = vld [vmem:[#allocation14 + $0x14] sm:$0xf]
    %v1474 = vld [vmem:[#allocation14 + $0x18] sm:$0xf]
    %v1475 = vld [vmem:[#allocation14 + $0x1c] sm:$0xf]
    %v1476 = vld [vmem:[#allocation14 + $0x20] sm:$0xf]
    %v1477 = vld [vmem:[#allocation14 + $0x24] sm:$0xf]
    %v1478 = vld [vmem:[#allocation14 + $0x28] sm:$0xf]
    %v1479 = vld [vmem:[#allocation14 + $0x2c] sm:$0xf]
    %v1480 = vld [vmem:[#allocation14 + $0x30] sm:$0xf]
    %v1481 = vld [vmem:[#allocation14 + $0x34] sm:$0xf]
    %v1482 = vld [vmem:[#allocation14 + $0x38] sm:$0xf]
    %v1483 = vld [vmem:[#allocation14 + $0x3c] sm:$0xf]
    %v1484 = vld [vmem:[%s7] sm:$0x1]
    %v1486 = vperm.slane %v1484, 0
    %v1504 = vunpack.c.l.b16 %v1468
    %v1505 = vunpack.c.l.b16 %v1469
    %v1506 = vunpack.c.l.b16 %v1470
    %v1507 = vunpack.c.l.b16 %v1471
    %v1508 = vunpack.c.l.b16 %v1472
    %v1509 = vunpack.c.l.b16 %v1473
    %v1510 = vunpack.c.l.b16 %v1474
    %v1511 = vunpack.c.l.b16 %v1475
    %v1512 = vunpack.c.l.b16 %v1476
    %v1513 = vunpack.c.l.b16 %v1477
    %v1514 = vunpack.c.l.b16 %v1478
    %v1515 = vunpack.c.l.b16 %v1479
    %v1516 = vunpack.c.l.b16 %v1480
    %v1517 = vunpack.c.l.b16 %v1481
    %v1518 = vunpack.c.l.b16 %v1482
    %v1519 = vunpack.c.l.b16 %v1483
    %v1520 = vpack.c.b16 %v1505, %v1504
    %v1521 = vpack.c.b16 %v1507, %v1506
    %v1522 = vpack.c.b16 %v1509, %v1508
    %v1523 = vpack.c.b16 %v1511, %v1510
    %v1524 = vpack.c.b16 %v1513, %v1512
    %v1525 = vpack.c.b16 %v1515, %v1514
    %v1526 = vpack.c.b16 %v1517, %v1516
    %v1527 = vpack.c.b16 %v1519, %v1518
    %1536 = vmatpush.bf16.msra.mxu0 %v1527
    %1537 = vmatpush.bf16.msra.mxu0 %v1526
    %1538 = vmatpush.bf16.msra.mxu0 %v1525
    %1539 = vmatpush.bf16.msra.mxu0 %v1524
    %1540 = vmatpush.bf16.msra.mxu0 %v1523
    %1541 = vmatpush.bf16.msra.mxu0 %v1522
    %1542 = vmatpush.bf16.msra.mxu0 %v1521
    %1543 = vmatpush.bf16.msra.mxu0 %v1520
    %1544 = vmatmul.bf16.gmra.mxu0 %v1467
    %v1545 = vpop.f32.mrf.mxu0
    %v1546 = vadd.f32 %v1486, %v1545
    %v1547 = vpop.f32.mrf.mxu0
    %1548 = vdwg.mxu0
    %v1549 = vxor.u32 %v1546, 2147483648
    %v1550 = vmul.f32 %v1549, 1.442695
    %v1551 = vpow.pop %v1550
    %v1552 = vadd.f32 %v1551, 1.0
    %v1553 = vrcp.pop %v1552
    %v1554 = vmul.f32 %v1552, %v1553
    %v1555 = vsub.f32 1.0, %v1554
    %v1556 = vmul.f32 %v1553, %v1555
    %v1557 = vadd.f32 %v1553, %v1556
    %vm1558 = vweird.f32 %v1552
    %vm1559 = vweird.f32 %v1553
    %vm1560 = vmor %vm1558, %vm1559
    %v1561 = vsel %vm1560, %v1553, %v1557
    %v1562 = vand.u32 2147483647, %v1552
    %vm1563 = vcmp.eq.f32.partialorder %v1562, 8.507059e+37
    %v1564 = vand.u32 %v1552, 2147483648
    %v1565 = vor.u32 1.1754944e-38, %v1564
    %v1566 = vsel %vm1563, %v1565, %v1561
    %v1567 = vmul.f32 1.0, %v1566
    %1568 = vst [vmem:[#allocation15] sm:$0xff] %v1567
    // Predicated region
    $region54: #{tpu_custom_call.1} parent=1 // pred_check
      _
    $region55: #{tpu_custom_call.1} parent=1 // pred_check_branch
      %1570 = sbr.rel (0) target = $region57
    $region56: #{tpu_custom_call.1} parent=1 // pred_region
      %1572 = vsyncadd [#allocation8], 0
      %s1574 = sshll.u32 [#allocation15], 4
      %s1575 = int_to_ptr.vmem [resolvable:$true] %s1574
      %s1576 = sshll.u32 %s8, 4
      %s1577 = int_to_ptr.hbm [resolvable:$true] %s1576
      %1579 = dma.vmem_to_hbm [thread:$0]  %s1575, 128, %s1577, [#allocation8]
    $region57: #{tpu_custom_call.1} parent=1 // pred_fallthru
      _
    // Predicated region
    $region58: #{tpu_custom_call.1} parent=1 // pred_check
      _
    $region59: #{tpu_custom_call.1} parent=1 // pred_check_branch
      %1581 = sbr.rel (0) target = $region61
    $region60: #{tpu_custom_call.1} parent=1 // pred_region
      %1583 = dma.done [#allocation8], 128
    $region61: #{tpu_custom_call.1} parent=1 // pred_fallthru
      _
    %1584 = vsyncpa [#allocation7], 1
    %1585 = vsyncpa [#allocation10], 1
    %1586 = vsyncpa [#allocation13], 1
    %1587 = vsyncpa [#allocation8], 1

</llo_original>
